<compile_context>
chip_gen: v6e
topology: v6e:2x2x1
jax: 0.10.0
libtpu: 0.0.40
codegen_flags: <defaults>
</compile_context>

<pallas_src>
import math
import functools

import jax
import jax.numpy as jnp
from jax.experimental import pallas as pl
from jax.experimental.pallas import tpu as pltpu


# ---------------------------------------------------------------------------
# helpers
# ---------------------------------------------------------------------------

def _pick_tile(dim, preferred, align):
    """Largest tile <= preferred that divides `dim` and is a multiple of
    `align`; falls back to the full dim (full-extent blocks are always legal)."""
    if dim <= preferred:
        return dim
    t = (preferred // align) * align
    while t >= align:
        if dim % t == 0:
            return t
        t -= align
    return dim


@functools.lru_cache(maxsize=None)
def _vmem_limit_bytes():
    """Generation-aware VMEM budget: ~96 MiB on 128 MiB parts (v5e/v6e),
    ~48 MiB on v7x (64 MiB physical)."""
    try:
        info = pltpu.get_tpu_info()
        cap = getattr(info, "vmem_capacity_bytes", None)
        if cap:
            return int(cap) * 3 // 4
    except Exception:
        pass
    return 48 * 1024 * 1024


def _cparams(dimension_semantics):
    return pltpu.CompilerParams(dimension_semantics=dimension_semantics,
                                vmem_limit_bytes=_vmem_limit_bytes())


# ---------------------------------------------------------------------------
# Kernel 1: fused per-(batch, head) QKV projection + scaled-dot-product attn
# ---------------------------------------------------------------------------

def _qkv_attn_kernel(x_ref, w_ref, b_ref, bias_ref, o_ref, *, dk, scale):
    x = x_ref[...].astype(jnp.bfloat16)                       # [L, D]
    qkv = jnp.dot(x, w_ref[...],                              # bf16 x bf16 -> f32
                  preferred_element_type=jnp.float32) + b_ref[...]
    q = qkv[:, 0 * dk:1 * dk]
    k = qkv[:, 1 * dk:2 * dk]
    v = qkv[:, 2 * dk:3 * dk]
    # scores = q @ k^T : contract the feature dim of both operands (no k.T)
    s = jax.lax.dot_general(q.astype(jnp.bfloat16), k.astype(jnp.bfloat16),
                            (((1,), (1,)), ((), ())),
                            preferred_element_type=jnp.float32)
    s = s * scale + bias_ref[...]                             # [L, L]; bias [1, L] broadcast
    s = s - jnp.max(s, axis=-1, keepdims=True)
    p = jnp.exp(s)
    p = p * pl.reciprocal(jnp.sum(p, axis=-1, keepdims=True), approx=True)
    o_ref[...] = jnp.dot(p.astype(jnp.bfloat16), v.astype(jnp.bfloat16),
                         preferred_element_type=jnp.float32).astype(o_ref.dtype)


def fused_qkv_attention(x, w_qkvh, b_qkvh, key_bias, n_head):
    """x: [B, L, D] f32; w_qkvh: [H, D, 3*dk] bf16; b_qkvh: [H, 1, 3*dk] f32;
    key_bias: [B, 1, L] f32 additive (0 / -1e9). Returns [B, H, L, dk] bf16."""
    B, L, D = x.shape
    H = n_head
    dk = D // H
    scale = 1.0 / math.sqrt(dk)
    # TODO(synk): for long L, tile the key axis with a flash-style online
    # softmax (running m/l/acc in VMEM scratch) instead of full [L, L] scores.
    return pl.pallas_call(
        functools.partial(_qkv_attn_kernel, dk=dk, scale=scale),
        out_shape=jax.ShapeDtypeStruct((B, H, L, dk), jnp.bfloat16),
        grid=(B, H),
        in_specs=[
            pl.BlockSpec((None, L, D), lambda b, h: (b, 0, 0)),        # x (stays resident across h)
            pl.BlockSpec((None, D, 3 * dk), lambda b, h: (h, 0, 0)),   # per-head fused QKV weights
            pl.BlockSpec((None, 1, 3 * dk), lambda b, h: (h, 0, 0)),   # per-head fused QKV bias
            pl.BlockSpec((None, 1, L), lambda b, h: (b, 0, 0)),        # key-padding additive bias
        ],
        out_specs=pl.BlockSpec((None, None, L, dk), lambda b, h: (b, h, 0, 0)),
        compiler_params=_cparams(("parallel", "parallel")),
    )(x, w_qkvh, b_qkvh, key_bias)


# ---------------------------------------------------------------------------
# Kernel 2: output projection (reduction over heads) + residual + LayerNorm1
# ---------------------------------------------------------------------------

def _oproj_add_ln_kernel(a_ref, w_ref, b_ref, r_ref, g_ref, beta_ref,
                         o_ref, acc_ref, *, eps):
    @pl.when(pl.program_id(1) == 0)
    def _():
        acc_ref[...] = jnp.zeros_like(acc_ref)

    acc_ref[...] += jnp.dot(a_ref[...], w_ref[...],
                            preferred_element_type=jnp.float32)

    @pl.when(pl.program_id(1) == pl.num_programs(1) - 1)
    def _():
        z = acc_ref[...] + b_ref[...] + r_ref[...].astype(jnp.float32)
        d = z.shape[-1]
        mean = jnp.mean(z, axis=-1, keepdims=True)
        diff = z - mean
        var = jnp.sum(diff * diff, axis=-1, keepdims=True) / (d - 1)  # torch.var: unbiased
        out = diff * jax.lax.rsqrt(var + eps)
        o_ref[...] = (g_ref[...] * out + beta_ref[...]).astype(o_ref.dtype)


def out_proj_add_layernorm(attn, w_oh, b_o, residual, gamma, beta, eps=1e-12):
    """attn: [B, H, L, dk] bf16; w_oh: [H, dk, D] bf16; residual: [B, L, D] f32."""
    B, H, L, dk = attn.shape
    D = H * dk
    # TODO(synk): for very long L, tile the query rows as an extra grid axis.
    return pl.pallas_call(
        functools.partial(_oproj_add_ln_kernel, eps=eps),
        out_shape=jax.ShapeDtypeStruct((B, L, D), residual.dtype),
        grid=(B, H),
        in_specs=[
            pl.BlockSpec((None, None, L, dk), lambda b, h: (b, h, 0, 0)),
            pl.BlockSpec((None, dk, D), lambda b, h: (h, 0, 0)),
            pl.BlockSpec((1, D), lambda b, h: (0, 0)),
            pl.BlockSpec((None, L, D), lambda b, h: (b, 0, 0)),
            pl.BlockSpec((1, D), lambda b, h: (0, 0)),
            pl.BlockSpec((1, D), lambda b, h: (0, 0)),
        ],
        out_specs=pl.BlockSpec((None, L, D), lambda b, h: (b, 0, 0)),
        scratch_shapes=[pltpu.VMEM((L, D), jnp.float32)],
        compiler_params=_cparams(("parallel", "arbitrary")),
    )(attn, w_oh, b_o.reshape(1, D), residual,
      gamma.reshape(1, D), beta.reshape(1, D))


# ---------------------------------------------------------------------------
# Kernel 3: tiled linear  y = (relu?)(x @ W + b)   (bf16 MXU operands)
# ---------------------------------------------------------------------------

def _linear_kernel(x_ref, w_ref, b_ref, o_ref, acc_ref, *, relu):
    @pl.when(pl.program_id(2) == 0)
    def _():
        acc_ref[...] = jnp.zeros_like(acc_ref)

    acc_ref[...] += jnp.dot(x_ref[...].astype(jnp.bfloat16), w_ref[...],
                            preferred_element_type=jnp.float32)

    @pl.when(pl.program_id(2) == pl.num_programs(2) - 1)
    def _():
        y = acc_ref[...] + b_ref[...]
        if relu:
            y = jnp.maximum(y, 0.0)
        o_ref[...] = y.astype(o_ref.dtype)


def linear(x2d, W, b, relu=False, out_dtype=None, tm=256, tn=512, tk=512):
    """y = x2d @ W + b   (W stored [in, out], bf16)."""
    M, K = x2d.shape
    K2, N = W.shape
    assert K == K2
    out_dtype = out_dtype or x2d.dtype
    tm = _pick_tile(M, tm, 8)
    tn = _pick_tile(N, tn, 128)
    tk = _pick_tile(K, tk, 128)
    grid = (M // tm, N // tn, K // tk)
    return pl.pallas_call(
        functools.partial(_linear_kernel, relu=relu),
        out_shape=jax.ShapeDtypeStruct((M, N), out_dtype),
        grid=grid,
        in_specs=[
            pl.BlockSpec((tm, tk), lambda i, j, k: (i, k)),
            pl.BlockSpec((tk, tn), lambda i, j, k: (k, j)),
            pl.BlockSpec((1, tn), lambda i, j, k: (0, j)),
        ],
        out_specs=pl.BlockSpec((tm, tn), lambda i, j, k: (i, j)),
        scratch_shapes=[pltpu.VMEM((tm, tn), jnp.float32)],
        compiler_params=_cparams(("parallel", "parallel", "arbitrary")),
    )(x2d, W, b.reshape(1, N).astype(jnp.float32))


# ---------------------------------------------------------------------------
# Kernel 4: fused linear + residual-add + LayerNorm2
# ---------------------------------------------------------------------------

def _linear_add_ln_kernel(x_ref, w_ref, b_ref, r_ref, g_ref, beta_ref,
                          o_ref, acc_ref, *, eps):
    @pl.when(pl.program_id(1) == 0)
    def _():
        acc_ref[...] = jnp.zeros_like(acc_ref)

    acc_ref[...] += jnp.dot(x_ref[...].astype(jnp.bfloat16), w_ref[...],
                            preferred_element_type=jnp.float32)

    @pl.when(pl.program_id(1) == pl.num_programs(1) - 1)
    def _():
        z = acc_ref[...] + b_ref[...] + r_ref[...].astype(jnp.float32)
        d = z.shape[-1]
        mean = jnp.mean(z, axis=-1, keepdims=True)
        diff = z - mean
        var = jnp.sum(diff * diff, axis=-1, keepdims=True) / (d - 1)  # torch.var: unbiased
        out = diff * jax.lax.rsqrt(var + eps)
        o_ref[...] = (g_ref[...] * out + beta_ref[...]).astype(o_ref.dtype)


def linear_add_layernorm(x2d, W, b, residual2d, gamma, beta,
                         eps=1e-12, tm=256, tk=512):
    """out = LayerNorm((x2d @ W + b) + residual2d)."""
    M, K = x2d.shape
    K2, N = W.shape
    assert K == K2 and residual2d.shape == (M, N)
    tm = _pick_tile(M, tm, 8)   # modest tm: acc/residual/out (tm,N) stay VMEM-resident
    tk = _pick_tile(K, tk, 128)
    grid = (M // tm, K // tk)
    return pl.pallas_call(
        functools.partial(_linear_add_ln_kernel, eps=eps),
        out_shape=jax.ShapeDtypeStruct((M, N), residual2d.dtype),
        grid=grid,
        in_specs=[
            pl.BlockSpec((tm, tk), lambda i, k: (i, k)),
            pl.BlockSpec((tk, N), lambda i, k: (k, 0)),
            pl.BlockSpec((1, N), lambda i, k: (0, 0)),
            pl.BlockSpec((tm, N), lambda i, k: (i, 0)),
            pl.BlockSpec((1, N), lambda i, k: (0, 0)),
            pl.BlockSpec((1, N), lambda i, k: (0, 0)),
        ],
        out_specs=pl.BlockSpec((tm, N), lambda i, k: (i, 0)),
        scratch_shapes=[pltpu.VMEM((tm, N), jnp.float32)],
        compiler_params=_cparams(("parallel", "arbitrary")),
    )(x2d, W, b.reshape(1, N).astype(jnp.float32), residual2d,
      gamma.reshape(1, N), beta.reshape(1, N))


# ---------------------------------------------------------------------------
# EncoderLayer forward (dropout = identity in eval mode)
# ---------------------------------------------------------------------------

def encoder_layer_forward(params, x, key_mask=None, *, n_head):
    """x: [B, L, D] f32.  key_mask: [B, L] (1 = valid key, 0 = padded) or None."""
    B, L, D = x.shape
    # TODO(synk): only key-padding masks [B, L] are plumbed; a fully general
    # [B, L, L] attention mask would need per-query-row bias blocks.
    if key_mask is None:
        key_bias = jnp.zeros((B, 1, L), jnp.float32)
    else:
        key_bias = jnp.where(key_mask == 0, -1.0e9, 0.0)
        key_bias = key_bias.astype(jnp.float32).reshape(B, 1, L)

    # fused per-(batch, head) QKV projection + attention -> [B, H, L, dk] bf16
    attn = fused_qkv_attention(x, params["w_qkvh"], params["b_qkvh"],
                               key_bias, n_head)

    # output projection (head reduction) + residual + LayerNorm1
    y = out_proj_add_layernorm(attn, params["w_oh"], params["b_o"],
                               x, params["ln1_g"], params["ln1_b"])

    # position-wise FFN: fc1 + relu (bf16 out), then fc2 + residual + LayerNorm2
    y2d = y.reshape(B * L, D)
    h = linear(y2d, params["w_ff1"], params["b_ff1"], relu=True,
               out_dtype=jnp.bfloat16)
    out2d = linear_add_layernorm(h, params["w_ff2"], params["b_ff2"],
                                 y2d, params["ln2_g"], params["ln2_b"])
    return out2d.reshape(B, L, D)


# ---------------------------------------------------------------------------
# Deterministic parameter initialization (weights stored bf16, biases/LN f32)
# ---------------------------------------------------------------------------

def _init_linear(key, d_in, d_out):
    kw, kb = jax.random.split(key)
    W = jax.random.normal(kw, (d_in, d_out), jnp.float32) * 0.02
    b = jax.random.normal(kb, (d_out,), jnp.float32) * 0.02
    return W, b


def init_encoder_layer_params(key, d_model, ffn_hidden, n_head):
    assert d_model % n_head == 0
    H, dk = n_head, d_model // n_head
    ks = jax.random.split(key, 6)
    wq, bq = _init_linear(ks[0], d_model, d_model)
    wk, bk = _init_linear(ks[1], d_model, d_model)
    wv, bv = _init_linear(ks[2], d_model, d_model)
    wo, bo = _init_linear(ks[3], d_model, d_model)
    w1, b1 = _init_linear(ks[4], d_model, ffn_hidden)
    w2, b2 = _init_linear(ks[5], ffn_hidden, d_model)

    # head-blocked fused QKV weights: [H, D, 3*dk] with columns q_h | k_h | v_h
    w_qkvh = jnp.concatenate([wq.reshape(d_model, H, dk),
                              wk.reshape(d_model, H, dk),
                              wv.reshape(d_model, H, dk)], axis=-1)   # [D, H, 3dk]
    w_qkvh = jnp.transpose(w_qkvh, (1, 0, 2)).astype(jnp.bfloat16)    # [H, D, 3dk]
    b_qkvh = jnp.concatenate([bq.reshape(H, dk), bk.reshape(H, dk),
                              bv.reshape(H, dk)], axis=-1)            # [H, 3dk]
    b_qkvh = b_qkvh.reshape(H, 1, 3 * dk).astype(jnp.float32)

    return dict(
        w_qkvh=w_qkvh, b_qkvh=b_qkvh,
        w_oh=wo.reshape(H, dk, d_model).astype(jnp.bfloat16), b_o=bo,
        w_ff1=w1.astype(jnp.bfloat16), b_ff1=b1,
        w_ff2=w2.astype(jnp.bfloat16), b_ff2=b2,
        ln1_g=jnp.ones((d_model,), jnp.float32),
        ln1_b=jnp.zeros((d_model,), jnp.float32),
        ln2_g=jnp.ones((d_model,), jnp.float32),
        ln2_b=jnp.zeros((d_model,), jnp.float32),
    )


# ---------------------------------------------------------------------------

if __name__ == "__main__":
    B, L = 2, 8
    d_model, ffn_hidden, n_head = 32, 64, 4

    key = jax.random.PRNGKey(0)
    kp, kx = jax.random.split(key)
    params = init_encoder_layer_params(kp, d_model, ffn_hidden, n_head)
    x = jax.random.normal(kx, (B, L, d_model), jnp.float32)

    # key-padding mask (1 = valid key, 0 = masked), shape [B, L]
    lengths = jnp.array([L, L - 2], jnp.int32)
    key_mask = (jnp.arange(L)[None, :] < lengths[:, None]).astype(jnp.int32)

    fwd = jax.jit(functools.partial(encoder_layer_forward, n_head=n_head))
    out = fwd(params, x, key_mask)
    jax.block_until_ready(out)

    assert out.shape == (B, L, d_model)
    assert bool(jnp.all(jnp.isfinite(out)))
    print("KERNEL_OK")
</pallas_src>

<mosaic_0001>
module attributes {stable_mosaic.version = 11 : i64} {
  func.func @_qkv_attn_kernel(%arg0: i32, %arg1: i32, %arg2: memref<1x8x32xf32, #tpu.memory_space<vmem>>, %arg3: memref<1x32x24xbf16, #tpu.memory_space<vmem>>, %arg4: memref<1x1x24xf32, #tpu.memory_space<vmem>>, %arg5: memref<1x1x8xf32, #tpu.memory_space<vmem>>, %arg6: memref<1x1x8x8xbf16, #tpu.memory_space<vmem>>) attributes {dimension_semantics = [#tpu.dimension_semantics<parallel>, #tpu.dimension_semantics<parallel>], iteration_bounds = array<i64: 2, 4>, scalar_prefetch = 0 : i64, scratch_operands = 0 : i64, tpu.core_type = #tpu.core_type<tc>, window_params = [{transform_indices = @transform_0, window_bounds = array<i64: 1, 8, 32>}, {transform_indices = @transform_1, window_bounds = array<i64: 1, 32, 24>}, {transform_indices = @transform_2, window_bounds = array<i64: 1, 1, 24>}, {transform_indices = @transform_3, window_bounds = array<i64: 1, 1, 8>}, {transform_indices = @transform_4, window_bounds = array<i64: 1, 1, 8, 8>}]} {
    %c0 = arith.constant 0 : index
    %c0_0 = arith.constant 0 : index
    %c0_1 = arith.constant 0 : index
    %0 = vector.load %arg2[%c0, %c0_0, %c0_1] : memref<1x8x32xf32, #tpu.memory_space<vmem>>, vector<1x8x32xf32>
    %1 = vector.shape_cast %0 : vector<1x8x32xf32> to vector<8x32xf32>
    %2 = arith.truncf %1 : vector<8x32xf32> to vector<8x32xbf16>
    %c0_2 = arith.constant 0 : index
    %c0_3 = arith.constant 0 : index
    %c0_4 = arith.constant 0 : index
    %3 = vector.load %arg3[%c0_2, %c0_3, %c0_4] : memref<1x32x24xbf16, #tpu.memory_space<vmem>>, vector<1x32x24xbf16>
    %4 = vector.shape_cast %3 : vector<1x32x24xbf16> to vector<32x24xbf16>
    %cst = arith.constant dense<0.000000e+00> : vector<8x24xf32>
    %5 = tpu.matmul %2, %4, %cst {dimension_numbers = #tpu.dot_dimension_numbers<[1], [0], [0], [1], [0, 0, 1, 1], [], []>} : vector<8x32xbf16>, vector<32x24xbf16>, vector<8x24xf32> -> vector<8x24xf32>
    %c0_5 = arith.constant 0 : index
    %c0_6 = arith.constant 0 : index
    %c0_7 = arith.constant 0 : index
    %6 = vector.load %arg4[%c0_5, %c0_6, %c0_7] : memref<1x1x24xf32, #tpu.memory_space<vmem>>, vector<1x1x24xf32>
    %7 = vector.shape_cast %6 : vector<1x1x24xf32> to vector<1x24xf32>
    %8 = vector.broadcast %7 : vector<1x24xf32> to vector<8x24xf32>
    %9 = arith.addf %5, %8 : vector<8x24xf32>
    %10 = vector.extract_strided_slice %9 {offsets = [0, 0], sizes = [8, 8], strides = [1, 1]} : vector<8x24xf32> to vector<8x8xf32>
    %11 = vector.extract_strided_slice %9 {offsets = [0, 8], sizes = [8, 8], strides = [1, 1]} : vector<8x24xf32> to vector<8x8xf32>
    %12 = vector.extract_strided_slice %9 {offsets = [0, 16], sizes = [8, 8], strides = [1, 1]} : vector<8x24xf32> to vector<8x8xf32>
    %13 = arith.truncf %10 : vector<8x8xf32> to vector<8x8xbf16>
    %14 = arith.truncf %11 : vector<8x8xf32> to vector<8x8xbf16>
    %cst_8 = arith.constant dense<0.000000e+00> : vector<8x8xf32>
    %15 = tpu.matmul %13, %14, %cst_8 {dimension_numbers = #tpu.dot_dimension_numbers<[1], [1], [0], [0], [0, 0, 1, 0], [], []>} : vector<8x8xbf16>, vector<8x8xbf16>, vector<8x8xf32> -> vector<8x8xf32>
    %cst_9 = arith.constant 0.353553385 : f32
    %16 = vector.broadcast %cst_9 : f32 to vector<8x8xf32>
    %17 = arith.mulf %15, %16 : vector<8x8xf32>
    %c0_10 = arith.constant 0 : index
    %c0_11 = arith.constant 0 : index
    %c0_12 = arith.constant 0 : index
    %18 = vector.load %arg5[%c0_10, %c0_11, %c0_12] : memref<1x1x8xf32, #tpu.memory_space<vmem>>, vector<1x1x8xf32>
    %19 = vector.shape_cast %18 : vector<1x1x8xf32> to vector<1x8xf32>
    %20 = vector.broadcast %19 : vector<1x8xf32> to vector<8x8xf32>
    %21 = arith.addf %17, %20 : vector<8x8xf32>
    %cst_13 = arith.constant dense<0xFF800000> : vector<8xf32>
    %22 = vector.multi_reduction <maximumf>, %21, %cst_13 [1] : vector<8x8xf32> to vector<8xf32>
    %23 = vector.shape_cast %22 : vector<8xf32> to vector<8x1xf32>
    %24 = vector.broadcast %23 : vector<8x1xf32> to vector<8x8xf32>
    %25 = arith.subf %21, %24 : vector<8x8xf32>
    %26 = math.exp %25 : vector<8x8xf32>
    %cst_14 = arith.constant dense<0.000000e+00> : vector<8xf32>
    %27 = vector.multi_reduction <add>, %26, %cst_14 [1] : vector<8x8xf32> to vector<8xf32>
    %28 = vector.shape_cast %27 : vector<8xf32> to vector<8x1xf32>
    %29 = tpu.reciprocal %28 {approx = true} : vector<8x1xf32> -> vector<8x1xf32>
    %30 = vector.broadcast %29 : vector<8x1xf32> to vector<8x8xf32>
    %31 = arith.mulf %26, %30 : vector<8x8xf32>
    %32 = arith.truncf %31 : vector<8x8xf32> to vector<8x8xbf16>
    %33 = arith.truncf %12 : vector<8x8xf32> to vector<8x8xbf16>
    %cst_15 = arith.constant dense<0.000000e+00> : vector<8x8xf32>
    %34 = tpu.matmul %32, %33, %cst_15 {dimension_numbers = #tpu.dot_dimension_numbers<[1], [0], [0], [1], [0, 0, 1, 1], [], []>} : vector<8x8xbf16>, vector<8x8xbf16>, vector<8x8xf32> -> vector<8x8xf32>
    %35 = arith.truncf %34 : vector<8x8xf32> to vector<8x8xbf16>
    %c0_16 = arith.constant 0 : index
    %c0_17 = arith.constant 0 : index
    %c0_18 = arith.constant 0 : index
    %c0_19 = arith.constant 0 : index
    %36 = vector.load %arg6[%c0_16, %c0_17, %c0_18, %c0_19] : memref<1x1x8x8xbf16, #tpu.memory_space<vmem>>, vector<1x1x8x8xbf16>
    %37 = vector.shape_cast %36 : vector<1x1x8x8xbf16> to vector<8x8xbf16>
    %38 = vector.shape_cast %35 : vector<8x8xbf16> to vector<1x1x8x8xbf16>
    tpu.vector_store %arg6[%c0_16, %c0_17, %c0_18, %c0_19], %38 {strides = array<i32>} : memref<1x1x8x8xbf16, #tpu.memory_space<vmem>>, vector<1x1x8x8xbf16>,
    return
  }
  func.func @transform_0(%arg0: i32, %arg1: i32) -> (i32, i32, i32) {
    %c0_i32 = arith.constant 0 : i32
    %c0_i32_0 = arith.constant 0 : i32
    %c0_i32_1 = arith.constant 0 : i32
    return %arg0, %c0_i32, %c0_i32_0 : i32, i32, i32
  }
  func.func @transform_1(%arg0: i32, %arg1: i32) -> (i32, i32, i32) {
    %c0_i32 = arith.constant 0 : i32
    %c0_i32_0 = arith.constant 0 : i32
    %c0_i32_1 = arith.constant 0 : i32
    return %arg1, %c0_i32, %c0_i32_0 : i32, i32, i32
  }
  func.func @transform_2(%arg0: i32, %arg1: i32) -> (i32, i32, i32) {
    %c0_i32 = arith.constant 0 : i32
    %c0_i32_0 = arith.constant 0 : i32
    %c0_i32_1 = arith.constant 0 : i32
    return %arg1, %c0_i32, %c0_i32_0 : i32, i32, i32
  }
  func.func @transform_3(%arg0: i32, %arg1: i32) -> (i32, i32, i32) {
    %c0_i32 = arith.constant 0 : i32
    %c0_i32_0 = arith.constant 0 : i32
    %c0_i32_1 = arith.constant 0 : i32
    return %arg0, %c0_i32, %c0_i32_0 : i32, i32, i32
  }
  func.func @transform_4(%arg0: i32, %arg1: i32) -> (i32, i32, i32, i32) {
    %c0_i32 = arith.constant 0 : i32
    %c0_i32_0 = arith.constant 0 : i32
    %c0_i32_1 = arith.constant 0 : i32
    return %arg0, %arg1, %c0_i32, %c0_i32_0 : i32, i32, i32, i32
  }
}

module attributes {stable_mosaic.version = 11 : i64} {
  func.func @_oproj_add_ln_kernel(%arg0: i32, %arg1: i32, %arg2: memref<1x1x8x8xbf16, #tpu.memory_space<vmem>>, %arg3: memref<1x8x32xbf16, #tpu.memory_space<vmem>>, %arg4: memref<1x32xf32, #tpu.memory_space<vmem>>, %arg5: memref<1x8x32xf32, #tpu.memory_space<vmem>>, %arg6: memref<1x32xf32, #tpu.memory_space<vmem>>, %arg7: memref<1x32xf32, #tpu.memory_space<vmem>>, %arg8: memref<1x8x32xf32, #tpu.memory_space<vmem>>, %arg9: memref<8x32xf32, #tpu.memory_space<vmem>>) attributes {dimension_semantics = [#tpu.dimension_semantics<parallel>, #tpu.dimension_semantics<arbitrary>], iteration_bounds = array<i64: 2, 4>, scalar_prefetch = 0 : i64, scratch_operands = 1 : i64, tpu.core_type = #tpu.core_type<tc>, window_params = [{transform_indices = @transform_0, window_bounds = array<i64: 1, 1, 8, 8>}, {transform_indices = @transform_1, window_bounds = array<i64: 1, 8, 32>}, {pipeline_mode = #tpu.pipeline_mode<synchronous>, transform_indices = @transform_2, window_bounds = array<i64: 1, 32>}, {transform_indices = @transform_3, window_bounds = array<i64: 1, 8, 32>}, {pipeline_mode = #tpu.pipeline_mode<synchronous>, transform_indices = @transform_4, window_bounds = array<i64: 1, 32>}, {pipeline_mode = #tpu.pipeline_mode<synchronous>, transform_indices = @transform_5, window_bounds = array<i64: 1, 32>}, {transform_indices = @transform_6, window_bounds = array<i64: 1, 8, 32>}]} {
    %c0_i32 = arith.constant 0 : i32
    %0 = arith.cmpi eq, %arg1, %c0_i32 : i32
    %1 = arith.extui %0 : i1 to i32
    %c0_i32_0 = arith.constant 0 : i32
    %2 = arith.cmpi ne, %1, %c0_i32_0 : i32
    scf.if %2 {
      %cst_12 = arith.constant 0.000000e+00 : f32
      %14 = vector.broadcast %cst_12 : f32 to vector<8x32xf32>
      %c0_13 = arith.constant 0 : index
      %c0_14 = arith.constant 0 : index
      %15 = vector.load %arg9[%c0_13, %c0_14] : memref<8x32xf32, #tpu.memory_space<vmem>>, vector<8x32xf32>
      tpu.vector_store %arg9[%c0_13, %c0_14], %14 {strides = array<i32>} : memref<8x32xf32, #tpu.memory_space<vmem>>, vector<8x32xf32>,
    } else {
    }
    %c0 = arith.constant 0 : index
    %c0_1 = arith.constant 0 : index
    %3 = vector.load %arg9[%c0, %c0_1] : memref<8x32xf32, #tpu.memory_space<vmem>>, vector<8x32xf32>
    %c0_2 = arith.constant 0 : index
    %c0_3 = arith.constant 0 : index
    %c0_4 = arith.constant 0 : index
    %c0_5 = arith.constant 0 : index
    %4 = vector.load %arg2[%c0_2, %c0_3, %c0_4, %c0_5] : memref<1x1x8x8xbf16, #tpu.memory_space<vmem>>, vector<1x1x8x8xbf16>
    %5 = vector.shape_cast %4 : vector<1x1x8x8xbf16> to vector<8x8xbf16>
    %c0_6 = arith.constant 0 : index
    %c0_7 = arith.constant 0 : index
    %c0_8 = arith.constant 0 : index
    %6 = vector.load %arg3[%c0_6, %c0_7, %c0_8] : memref<1x8x32xbf16, #tpu.memory_space<vmem>>, vector<1x8x32xbf16>
    %7 = vector.shape_cast %6 : vector<1x8x32xbf16> to vector<8x32xbf16>
    %cst = arith.constant dense<0.000000e+00> : vector<8x32xf32>
    %8 = tpu.matmul %5, %7, %cst {dimension_numbers = #tpu.dot_dimension_numbers<[1], [0], [0], [1], [0, 0, 1, 1], [], []>} : vector<8x8xbf16>, vector<8x32xbf16>, vector<8x32xf32> -> vector<8x32xf32>
    %9 = arith.addf %3, %8 : vector<8x32xf32>
    %c0_9 = arith.constant 0 : index
    %c0_10 = arith.constant 0 : index
    %10 = vector.load %arg9[%c0_9, %c0_10] : memref<8x32xf32, #tpu.memory_space<vmem>>, vector<8x32xf32>
    tpu.vector_store %arg9[%c0_9, %c0_10], %9 {strides = array<i32>} : memref<8x32xf32, #tpu.memory_space<vmem>>, vector<8x32xf32>,
    %c3_i32 = arith.constant 3 : i32
    %11 = arith.cmpi eq, %arg1, %c3_i32 : i32
    %12 = arith.extui %11 : i1 to i32
    %c0_i32_11 = arith.constant 0 : i32
    %13 = arith.cmpi ne, %12, %c0_i32_11 : i32
    scf.if %13 {
      %c0_12 = arith.constant 0 : index
      %c0_13 = arith.constant 0 : index
      %14 = vector.load %arg9[%c0_12, %c0_13] : memref<8x32xf32, #tpu.memory_space<vmem>>, vector<8x32xf32>
      %c0_14 = arith.constant 0 : index
      %c0_15 = arith.constant 0 : index
      %15 = vector.load %arg4[%c0_14, %c0_15] : memref<1x32xf32, #tpu.memory_space<vmem>>, vector<1x32xf32>
      %16 = vector.broadcast %15 : vector<1x32xf32> to vector<8x32xf32>
      %17 = arith.addf %14, %16 : vector<8x32xf32>
      %c0_16 = arith.constant 0 : index
      %c0_17 = arith.constant 0 : index
      %c0_18 = arith.constant 0 : index
      %18 = vector.load %arg5[%c0_16, %c0_17, %c0_18] : memref<1x8x32xf32, #tpu.memory_space<vmem>>, vector<1x8x32xf32>
      %19 = vector.shape_cast %18 : vector<1x8x32xf32> to vector<8x32xf32>
      %20 = arith.addf %17, %19 : vector<8x32xf32>
      %cst_19 = arith.constant dense<0.000000e+00> : vector<8xf32>
      %21 = vector.multi_reduction <add>, %20, %cst_19 [1] : vector<8x32xf32> to vector<8xf32>
      %22 = vector.shape_cast %21 : vector<8xf32> to vector<8x1xf32>
      %cst_20 = arith.constant 3.200000e+01 : f32
      %23 = vector.broadcast %cst_20 : f32 to vector<8x1xf32>
      %24 = arith.divf %22, %23 : vector<8x1xf32>
      %25 = vector.broadcast %24 : vector<8x1xf32> to vector<8x32xf32>
      %26 = arith.subf %20, %25 : vector<8x32xf32>
      %27 = arith.mulf %26, %26 : vector<8x32xf32>
      %cst_21 = arith.constant dense<0.000000e+00> : vector<8xf32>
      %28 = vector.multi_reduction <add>, %27, %cst_21 [1] : vector<8x32xf32> to vector<8xf32>
      %29 = vector.shape_cast %28 : vector<8xf32> to vector<8x1xf32>
      %cst_22 = arith.constant 3.100000e+01 : f32
      %30 = vector.broadcast %cst_22 : f32 to vector<8x1xf32>
      %31 = arith.divf %29, %30 : vector<8x1xf32>
      %cst_23 = arith.constant 9.99999996E-13 : f32
      %32 = vector.broadcast %cst_23 : f32 to vector<8x1xf32>
      %33 = arith.addf %31, %32 : vector<8x1xf32>
      %34 = math.rsqrt %33 : vector<8x1xf32>
      %35 = vector.broadcast %34 : vector<8x1xf32> to vector<8x32xf32>
      %36 = arith.mulf %26, %35 : vector<8x32xf32>
      %c0_24 = arith.constant 0 : index
      %c0_25 = arith.constant 0 : index
      %37 = vector.load %arg6[%c0_24, %c0_25] : memref<1x32xf32, #tpu.memory_space<vmem>>, vector<1x32xf32>
      %38 = vector.broadcast %37 : vector<1x32xf32> to vector<8x32xf32>
      %39 = arith.mulf %38, %36 : vector<8x32xf32>
      %c0_26 = arith.constant 0 : index
      %c0_27 = arith.constant 0 : index
      %40 = vector.load %arg7[%c0_26, %c0_27] : memref<1x32xf32, #tpu.memory_space<vmem>>, vector<1x32xf32>
      %41 = vector.broadcast %40 : vector<1x32xf32> to vector<8x32xf32>
      %42 = arith.addf %39, %41 : vector<8x32xf32>
      %c0_28 = arith.constant 0 : index
      %c0_29 = arith.constant 0 : index
      %c0_30 = arith.constant 0 : index
      %43 = vector.load %arg8[%c0_28, %c0_29, %c0_30] : memref<1x8x32xf32, #tpu.memory_space<vmem>>, vector<1x8x32xf32>
      %44 = vector.shape_cast %43 : vector<1x8x32xf32> to vector<8x32xf32>
      %45 = vector.shape_cast %42 : vector<8x32xf32> to vector<1x8x32xf32>
      tpu.vector_store %arg8[%c0_28, %c0_29, %c0_30], %45 {strides = array<i32>} : memref<1x8x32xf32, #tpu.memory_space<vmem>>, vector<1x8x32xf32>,
    } else {
    }
    return
  }
  func.func @transform_0(%arg0: i32, %arg1: i32) -> (i32, i32, i32, i32) {
    %c0_i32 = arith.constant 0 : i32
    %c0_i32_0 = arith.constant 0 : i32
    %c0_i32_1 = arith.constant 0 : i32
    return %arg0, %arg1, %c0_i32, %c0_i32_0 : i32, i32, i32, i32
  }
  func.func @transform_1(%arg0: i32, %arg1: i32) -> (i32, i32, i32) {
    %c0_i32 = arith.constant 0 : i32
    %c0_i32_0 = arith.constant 0 : i32
    %c0_i32_1 = arith.constant 0 : i32
    return %arg1, %c0_i32, %c0_i32_0 : i32, i32, i32
  }
  func.func @transform_2(%arg0: i32, %arg1: i32) -> (i32, i32) {
    %c0_i32 = arith.constant 0 : i32
    %c0_i32_0 = arith.constant 0 : i32
    %c0_i32_1 = arith.constant 0 : i32
    return %c0_i32, %c0_i32_0 : i32, i32
  }
  func.func @transform_3(%arg0: i32, %arg1: i32) -> (i32, i32, i32) {
    %c0_i32 = arith.constant 0 : i32
    %c0_i32_0 = arith.constant 0 : i32
    %c0_i32_1 = arith.constant 0 : i32
    return %arg0, %c0_i32, %c0_i32_0 : i32, i32, i32
  }
  func.func @transform_4(%arg0: i32, %arg1: i32) -> (i32, i32) {
    %c0_i32 = arith.constant 0 : i32
    %c0_i32_0 = arith.constant 0 : i32
    %c0_i32_1 = arith.constant 0 : i32
    return %c0_i32, %c0_i32_0 : i32, i32
  }
  func.func @transform_5(%arg0: i32, %arg1: i32) -> (i32, i32) {
    %c0_i32 = arith.constant 0 : i32
    %c0_i32_0 = arith.constant 0 : i32
    %c0_i32_1 = arith.constant 0 : i32
    return %c0_i32, %c0_i32_0 : i32, i32
  }
  func.func @transform_6(%arg0: i32, %arg1: i32) -> (i32, i32, i32) {
    %c0_i32 = arith.constant 0 : i32
    %c0_i32_0 = arith.constant 0 : i32
    %c0_i32_1 = arith.constant 0 : i32
    return %arg0, %c0_i32, %c0_i32_0 : i32, i32, i32
  }
}

module attributes {stable_mosaic.version = 11 : i64} {
  func.func @_linear_kernel(%arg0: i32, %arg1: i32, %arg2: i32, %arg3: memref<16x32xf32, #tpu.memory_space<vmem>>, %arg4: memref<32x64xbf16, #tpu.memory_space<vmem>>, %arg5: memref<1x64xf32, #tpu.memory_space<vmem>>, %arg6: memref<16x64xbf16, #tpu.memory_space<vmem>>, %arg7: memref<16x64xf32, #tpu.memory_space<vmem>>) attributes {dimension_semantics = [#tpu.dimension_semantics<parallel>, #tpu.dimension_semantics<parallel>, #tpu.dimension_semantics<arbitrary>], iteration_bounds = array<i64: 1, 1, 1>, scalar_prefetch = 0 : i64, scratch_operands = 1 : i64, tpu.core_type = #tpu.core_type<tc>, window_params = [{transform_indices = @transform_0, window_bounds = array<i64: 16, 32>}, {transform_indices = @transform_1, window_bounds = array<i64: 32, 64>}, {transform_indices = @transform_2, window_bounds = array<i64: 1, 64>}, {transform_indices = @transform_3, window_bounds = array<i64: 16, 64>}]} {
    %c0_i32 = arith.constant 0 : i32
    %0 = arith.cmpi eq, %arg2, %c0_i32 : i32
    %1 = arith.extui %0 : i1 to i32
    %c0_i32_0 = arith.constant 0 : i32
    %2 = arith.cmpi ne, %1, %c0_i32_0 : i32
    scf.if %2 {
      %cst_10 = arith.constant 0.000000e+00 : f32
      %13 = vector.broadcast %cst_10 : f32 to vector<16x64xf32>
      %c0_11 = arith.constant 0 : index
      %c0_12 = arith.constant 0 : index
      %14 = vector.load %arg7[%c0_11, %c0_12] : memref<16x64xf32, #tpu.memory_space<vmem>>, vector<16x64xf32>
      tpu.vector_store %arg7[%c0_11, %c0_12], %13 {strides = array<i32>} : memref<16x64xf32, #tpu.memory_space<vmem>>, vector<16x64xf32>,
    } else {
    }
    %c0 = arith.constant 0 : index
    %c0_1 = arith.constant 0 : index
    %3 = vector.load %arg7[%c0, %c0_1] : memref<16x64xf32, #tpu.memory_space<vmem>>, vector<16x64xf32>
    %c0_2 = arith.constant 0 : index
    %c0_3 = arith.constant 0 : index
    %4 = vector.load %arg3[%c0_2, %c0_3] : memref<16x32xf32, #tpu.memory_space<vmem>>, vector<16x32xf32>
    %5 = arith.truncf %4 : vector<16x32xf32> to vector<16x32xbf16>
    %c0_4 = arith.constant 0 : index
    %c0_5 = arith.constant 0 : index
    %6 = vector.load %arg4[%c0_4, %c0_5] : memref<32x64xbf16, #tpu.memory_space<vmem>>, vector<32x64xbf16>
    %cst = arith.constant dense<0.000000e+00> : vector<16x64xf32>
    %7 = tpu.matmul %5, %6, %cst {dimension_numbers = #tpu.dot_dimension_numbers<[1], [0], [0], [1], [0, 0, 1, 1], [], []>} : vector<16x32xbf16>, vector<32x64xbf16>, vector<16x64xf32> -> vector<16x64xf32>
    %8 = arith.addf %3, %7 : vector<16x64xf32>
    %c0_6 = arith.constant 0 : index
    %c0_7 = arith.constant 0 : index
    %9 = vector.load %arg7[%c0_6, %c0_7] : memref<16x64xf32, #tpu.memory_space<vmem>>, vector<16x64xf32>
    tpu.vector_store %arg7[%c0_6, %c0_7], %8 {strides = array<i32>} : memref<16x64xf32, #tpu.memory_space<vmem>>, vector<16x64xf32>,
    %c0_i32_8 = arith.constant 0 : i32
    %10 = arith.cmpi eq, %arg2, %c0_i32_8 : i32
    %11 = arith.extui %10 : i1 to i32
    %c0_i32_9 = arith.constant 0 : i32
    %12 = arith.cmpi ne, %11, %c0_i32_9 : i32
    scf.if %12 {
      %c0_10 = arith.constant 0 : index
      %c0_11 = arith.constant 0 : index
      %13 = vector.load %arg7[%c0_10, %c0_11] : memref<16x64xf32, #tpu.memory_space<vmem>>, vector<16x64xf32>
      %c0_12 = arith.constant 0 : index
      %c0_13 = arith.constant 0 : index
      %14 = vector.load %arg5[%c0_12, %c0_13] : memref<1x64xf32, #tpu.memory_space<vmem>>, vector<1x64xf32>
      %15 = vector.broadcast %14 : vector<1x64xf32> to vector<16x64xf32>
      %16 = arith.addf %13, %15 : vector<16x64xf32>
      %cst_14 = arith.constant 0.000000e+00 : f32
      %17 = vector.broadcast %cst_14 : f32 to vector<16x64xf32>
      %18 = arith.maximumf %16, %17 : vector<16x64xf32>
      %19 = arith.truncf %18 : vector<16x64xf32> to vector<16x64xbf16>
      %c0_15 = arith.constant 0 : index
      %c0_16 = arith.constant 0 : index
      %20 = vector.load %arg6[%c0_15, %c0_16] : memref<16x64xbf16, #tpu.memory_space<vmem>>, vector<16x64xbf16>
      tpu.vector_store %arg6[%c0_15, %c0_16], %19 {strides = array<i32>} : memref<16x64xbf16, #tpu.memory_space<vmem>>, vector<16x64xbf16>,
    } else {
    }
    return
  }
  func.func @transform_0(%arg0: i32, %arg1: i32, %arg2: i32) -> (i32, i32) {
    %c0_i32 = arith.constant 0 : i32
    return %arg0, %arg2 : i32, i32
  }
  func.func @transform_1(%arg0: i32, %arg1: i32, %arg2: i32) -> (i32, i32) {
    %c0_i32 = arith.constant 0 : i32
    return %arg2, %arg1 : i32, i32
  }
  func.func @transform_2(%arg0: i32, %arg1: i32, %arg2: i32) -> (i32, i32) {
    %c0_i32 = arith.constant 0 : i32
    %c0_i32_0 = arith.constant 0 : i32
    return %c0_i32, %arg1 : i32, i32
  }
  func.func @transform_3(%arg0: i32, %arg1: i32, %arg2: i32) -> (i32, i32) {
    %c0_i32 = arith.constant 0 : i32
    return %arg0, %arg1 : i32, i32
  }
}

module attributes {stable_mosaic.version = 11 : i64} {
  func.func @_linear_add_ln_kernel(%arg0: i32, %arg1: i32, %arg2: memref<16x64xbf16, #tpu.memory_space<vmem>>, %arg3: memref<64x32xbf16, #tpu.memory_space<vmem>>, %arg4: memref<1x32xf32, #tpu.memory_space<vmem>>, %arg5: memref<16x32xf32, #tpu.memory_space<vmem>>, %arg6: memref<1x32xf32, #tpu.memory_space<vmem>>, %arg7: memref<1x32xf32, #tpu.memory_space<vmem>>, %arg8: memref<16x32xf32, #tpu.memory_space<vmem>>, %arg9: memref<16x32xf32, #tpu.memory_space<vmem>>) attributes {dimension_semantics = [#tpu.dimension_semantics<parallel>, #tpu.dimension_semantics<arbitrary>], iteration_bounds = array<i64: 1, 1>, scalar_prefetch = 0 : i64, scratch_operands = 1 : i64, tpu.core_type = #tpu.core_type<tc>, window_params = [{transform_indices = @transform_0, window_bounds = array<i64: 16, 64>}, {transform_indices = @transform_1, window_bounds = array<i64: 64, 32>}, {pipeline_mode = #tpu.pipeline_mode<synchronous>, transform_indices = @transform_2, window_bounds = array<i64: 1, 32>}, {transform_indices = @transform_3, window_bounds = array<i64: 16, 32>}, {pipeline_mode = #tpu.pipeline_mode<synchronous>, transform_indices = @transform_4, window_bounds = array<i64: 1, 32>}, {pipeline_mode = #tpu.pipeline_mode<synchronous>, transform_indices = @transform_5, window_bounds = array<i64: 1, 32>}, {transform_indices = @transform_6, window_bounds = array<i64: 16, 32>}]} {
    %c0_i32 = arith.constant 0 : i32
    %0 = arith.cmpi eq, %arg1, %c0_i32 : i32
    %1 = arith.extui %0 : i1 to i32
    %c0_i32_0 = arith.constant 0 : i32
    %2 = arith.cmpi ne, %1, %c0_i32_0 : i32
    scf.if %2 {
      %cst_10 = arith.constant 0.000000e+00 : f32
      %12 = vector.broadcast %cst_10 : f32 to vector<16x32xf32>
      %c0_11 = arith.constant 0 : index
      %c0_12 = arith.constant 0 : index
      %13 = vector.load %arg9[%c0_11, %c0_12] : memref<16x32xf32, #tpu.memory_space<vmem>>, vector<16x32xf32>
      tpu.vector_store %arg9[%c0_11, %c0_12], %12 {strides = array<i32>} : memref<16x32xf32, #tpu.memory_space<vmem>>, vector<16x32xf32>,
    } else {
    }
    %c0 = arith.constant 0 : index
    %c0_1 = arith.constant 0 : index
    %3 = vector.load %arg9[%c0, %c0_1] : memref<16x32xf32, #tpu.memory_space<vmem>>, vector<16x32xf32>
    %c0_2 = arith.constant 0 : index
    %c0_3 = arith.constant 0 : index
    %4 = vector.load %arg2[%c0_2, %c0_3] : memref<16x64xbf16, #tpu.memory_space<vmem>>, vector<16x64xbf16>
    %c0_4 = arith.constant 0 : index
    %c0_5 = arith.constant 0 : index
    %5 = vector.load %arg3[%c0_4, %c0_5] : memref<64x32xbf16, #tpu.memory_space<vmem>>, vector<64x32xbf16>
    %cst = arith.constant dense<0.000000e+00> : vector<16x32xf32>
    %6 = tpu.matmul %4, %5, %cst {dimension_numbers = #tpu.dot_dimension_numbers<[1], [0], [0], [1], [0, 0, 1, 1], [], []>} : vector<16x64xbf16>, vector<64x32xbf16>, vector<16x32xf32> -> vector<16x32xf32>
    %7 = arith.addf %3, %6 : vector<16x32xf32>
    %c0_6 = arith.constant 0 : index
    %c0_7 = arith.constant 0 : index
    %8 = vector.load %arg9[%c0_6, %c0_7] : memref<16x32xf32, #tpu.memory_space<vmem>>, vector<16x32xf32>
    tpu.vector_store %arg9[%c0_6, %c0_7], %7 {strides = array<i32>} : memref<16x32xf32, #tpu.memory_space<vmem>>, vector<16x32xf32>,
    %c0_i32_8 = arith.constant 0 : i32
    %9 = arith.cmpi eq, %arg1, %c0_i32_8 : i32
    %10 = arith.extui %9 : i1 to i32
    %c0_i32_9 = arith.constant 0 : i32
    %11 = arith.cmpi ne, %10, %c0_i32_9 : i32
    scf.if %11 {
      %c0_10 = arith.constant 0 : index
      %c0_11 = arith.constant 0 : index
      %12 = vector.load %arg9[%c0_10, %c0_11] : memref<16x32xf32, #tpu.memory_space<vmem>>, vector<16x32xf32>
      %c0_12 = arith.constant 0 : index
      %c0_13 = arith.constant 0 : index
      %13 = vector.load %arg4[%c0_12, %c0_13] : memref<1x32xf32, #tpu.memory_space<vmem>>, vector<1x32xf32>
      %14 = vector.broadcast %13 : vector<1x32xf32> to vector<16x32xf32>
      %15 = arith.addf %12, %14 : vector<16x32xf32>
      %c0_14 = arith.constant 0 : index
      %c0_15 = arith.constant 0 : index
      %16 = vector.load %arg5[%c0_14, %c0_15] : memref<16x32xf32, #tpu.memory_space<vmem>>, vector<16x32xf32>
      %17 = arith.addf %15, %16 : vector<16x32xf32>
      %cst_16 = arith.constant dense<0.000000e+00> : vector<16xf32>
      %18 = vector.multi_reduction <add>, %17, %cst_16 [1] : vector<16x32xf32> to vector<16xf32>
      %19 = vector.shape_cast %18 : vector<16xf32> to vector<16x1xf32>
      %cst_17 = arith.constant 3.200000e+01 : f32
      %20 = vector.broadcast %cst_17 : f32 to vector<16x1xf32>
      %21 = arith.divf %19, %20 : vector<16x1xf32>
      %22 = vector.broadcast %21 : vector<16x1xf32> to vector<16x32xf32>
      %23 = arith.subf %17, %22 : vector<16x32xf32>
      %24 = arith.mulf %23, %23 : vector<16x32xf32>
      %cst_18 = arith.constant dense<0.000000e+00> : vector<16xf32>
      %25 = vector.multi_reduction <add>, %24, %cst_18 [1] : vector<16x32xf32> to vector<16xf32>
      %26 = vector.shape_cast %25 : vector<16xf32> to vector<16x1xf32>
      %cst_19 = arith.constant 3.100000e+01 : f32
      %27 = vector.broadcast %cst_19 : f32 to vector<16x1xf32>
      %28 = arith.divf %26, %27 : vector<16x1xf32>
      %cst_20 = arith.constant 9.99999996E-13 : f32
      %29 = vector.broadcast %cst_20 : f32 to vector<16x1xf32>
      %30 = arith.addf %28, %29 : vector<16x1xf32>
      %31 = math.rsqrt %30 : vector<16x1xf32>
      %32 = vector.broadcast %31 : vector<16x1xf32> to vector<16x32xf32>
      %33 = arith.mulf %23, %32 : vector<16x32xf32>
      %c0_21 = arith.constant 0 : index
      %c0_22 = arith.constant 0 : index
      %34 = vector.load %arg6[%c0_21, %c0_22] : memref<1x32xf32, #tpu.memory_space<vmem>>, vector<1x32xf32>
      %35 = vector.broadcast %34 : vector<1x32xf32> to vector<16x32xf32>
      %36 = arith.mulf %35, %33 : vector<16x32xf32>
      %c0_23 = arith.constant 0 : index
      %c0_24 = arith.constant 0 : index
      %37 = vector.load %arg7[%c0_23, %c0_24] : memref<1x32xf32, #tpu.memory_space<vmem>>, vector<1x32xf32>
      %38 = vector.broadcast %37 : vector<1x32xf32> to vector<16x32xf32>
      %39 = arith.addf %36, %38 : vector<16x32xf32>
      %c0_25 = arith.constant 0 : index
      %c0_26 = arith.constant 0 : index
      %40 = vector.load %arg8[%c0_25, %c0_26] : memref<16x32xf32, #tpu.memory_space<vmem>>, vector<16x32xf32>
      tpu.vector_store %arg8[%c0_25, %c0_26], %39 {strides = array<i32>} : memref<16x32xf32, #tpu.memory_space<vmem>>, vector<16x32xf32>,
    } else {
    }
    return
  }
  func.func @transform_0(%arg0: i32, %arg1: i32) -> (i32, i32) {
    %c0_i32 = arith.constant 0 : i32
    return %arg0, %arg1 : i32, i32
  }
  func.func @transform_1(%arg0: i32, %arg1: i32) -> (i32, i32) {
    %c0_i32 = arith.constant 0 : i32
    %c0_i32_0 = arith.constant 0 : i32
    return %arg1, %c0_i32 : i32, i32
  }
  func.func @transform_2(%arg0: i32, %arg1: i32) -> (i32, i32) {
    %c0_i32 = arith.constant 0 : i32
    %c0_i32_0 = arith.constant 0 : i32
    %c0_i32_1 = arith.constant 0 : i32
    return %c0_i32, %c0_i32_0 : i32, i32
  }
  func.func @transform_3(%arg0: i32, %arg1: i32) -> (i32, i32) {
    %c0_i32 = arith.constant 0 : i32
    %c0_i32_0 = arith.constant 0 : i32
    return %arg0, %c0_i32 : i32, i32
  }
  func.func @transform_4(%arg0: i32, %arg1: i32) -> (i32, i32) {
    %c0_i32 = arith.constant 0 : i32
    %c0_i32_0 = arith.constant 0 : i32
    %c0_i32_1 = arith.constant 0 : i32
    return %c0_i32, %c0_i32_0 : i32, i32
  }
  func.func @transform_5(%arg0: i32, %arg1: i32) -> (i32, i32) {
    %c0_i32 = arith.constant 0 : i32
    %c0_i32_0 = arith.constant 0 : i32
    %c0_i32_1 = arith.constant 0 : i32
    return %c0_i32, %c0_i32_0 : i32, i32
  }
  func.func @transform_6(%arg0: i32, %arg1: i32) -> (i32, i32) {
    %c0_i32 = arith.constant 0 : i32
    %c0_i32_0 = arith.constant 0 : i32
    return %arg0, %c0_i32 : i32, i32
  }
}

</mosaic_0001>

<llo_original>
// kernel: encoder_layer_forward.4
$region0: #{encoder_layer_forward.4}
  #allocation0 [shape = 'u32[]', space=smem, size = 0x4, offset = 0x4, fixed_abs, tag = 'smem constant byte address 0x4 - core index']
  #allocation1 [shape = 'u32[144,128]{1,0:T(1,128)}', space=vmem, size = 0x12000, scoped, tag = 'internal scratch']
  %s0 = inlined_call_operand.vmem [shape: f32[2,8,32], index: 0, kind: input, shape index: {}]
  %s1 = inlined_call_operand.vmem [shape: bf16[4,32,24], index: 1, kind: input, shape index: {}]
  %s2 = inlined_call_operand.vmem [shape: f32[4,1,24], index: 2, kind: input, shape index: {}]
  %s3 = inlined_call_operand.vmem [shape: f32[2,1,8], index: 3, kind: input, shape index: {}]
  %s4 = inlined_call_operand.vmem [shape: bf16[2,4,8,8], index: 4, kind: output, shape index: {}]
  %s5 = sld [smem:[#allocation0]]
  $region49: #{encoder_layer_forward.4} parent=0
    _
  %s7 = ssub.s32 1, %s5
  %s8 = scalar_select 0, %s7, %s5
  loop: start=0, step=1, limit=10
  $region2: #{encoder_layer_forward.4} parent=0 // loop_pre_header
    _
  $region3: #{encoder_layer_forward.4} parent=0 // loop_header
    %s10 = sphi 0, %s14
    %p11 = scmp.ge.s32.totalorder %s10, 10
    %s17 = sphi 0, %s29
    %s18 = sphi 0, %s25
    %s19 = sphi 0, %s17
    %s20 = sphi 0, %s18
    %s21 = sphi 0, %s19
    %s22 = sphi 0, %s20
    %s32 = sphi 0, %s34
    %s35 = sphi 0, %s32
    %s36 = sphi 0, %s35
    %s52 = sphi 0, %s36
    %s58 = sphi 0, %s60
    %s61 = sphi 0, %s58
    %s62 = sphi 0, %s61
    %s78 = sphi 0, %s62
    %s84 = sphi 0, %s86
    %s87 = sphi 0, %s84
    %s88 = sphi 0, %s87
    %s104 = sphi 0, %s88
    %s110 = sphi 0, %s112
    %s113 = sphi 0, %s110
    %s114 = sphi 0, %s113
    %s130 = sphi 0, %s114
    %s138 = sphi 0, %s140
    %s141 = sphi 0, %s138
    %s142 = sphi 0, %s141
    %s158 = sphi 0, %s142
  $region4: #{encoder_layer_forward.4} parent=0 // loop_header_branch
    %13 = sbr.rel (%p11) target = $region8
  $region5: #{encoder_layer_forward.4} parent=0 // loop_body
    %s15 = ssub.s32 %s10, 1
    %s16 = ssub.s32 %s10, 2
    %s23 = sadd.s32 1, %s18
    %p24 = scmp.ge.s32.totalorder %s23, 4
    %s25 = scalar_select %p24, 0, %s23
    %s26 = sadd.s32 1, %s17
    %s27 = scalar_select %p24, %s26, %s17
    %p28 = scmp.ge.s32.totalorder %s27, 2
    %s29 = scalar_select %p28, 0, %s27
    %s30 = ssub.s32 %s17, %s29
    %p31 = scmp.eq.s32.totalorder %s30, 0
    %s33 = sadd.s32 %s32, 1
    %s34 = scalar_select %p31, %s32, %s33
    %p37 = pneg %p31
    %p38 = scmp.eq.s32.totalorder %s10, 7
    %p39 = por %p37, %p38
    %p40 = scmp.ne.s32.totalorder %s32, %s35
    %p41 = scmp.eq.s32.totalorder %s10, 0
    %p42 = por %p40, %p41
    %p43 = scmp.ne.s32.totalorder %s32, %s35
    %p44 = scmp.eq.s32.totalorder %s15, 7
    %p45 = por %p43, %p44
    %p46 = scmp.ne.s32.totalorder %s35, %s36
    %p47 = scmp.eq.s32.totalorder %s15, 0
    %p48 = por %p46, %p47
    %p49 = scmp.ne.s32.totalorder %s35, %s36
    %p50 = scmp.eq.s32.totalorder %s16, 7
    %p51 = por %p49, %p50
    %p53 = scmp.ne.s32.totalorder %s36, %s52
    %p54 = scmp.eq.s32.totalorder %s16, 0
    %p55 = por %p53, %p54
    %s56 = ssub.s32 %s18, %s25
    %p57 = scmp.eq.s32.totalorder %s56, 0
    %s59 = sadd.s32 %s58, 1
    %s60 = scalar_select %p57, %s58, %s59
    %p63 = pneg %p57
    %p64 = scmp.eq.s32.totalorder %s10, 7
    %p65 = por %p63, %p64
    %p66 = scmp.ne.s32.totalorder %s58, %s61
    %p67 = scmp.eq.s32.totalorder %s10, 0
    %p68 = por %p66, %p67
    %p69 = scmp.ne.s32.totalorder %s58, %s61
    %p70 = scmp.eq.s32.totalorder %s15, 7
    %p71 = por %p69, %p70
    %p72 = scmp.ne.s32.totalorder %s61, %s62
    %p73 = scmp.eq.s32.totalorder %s15, 0
    %p74 = por %p72, %p73
    %p75 = scmp.ne.s32.totalorder %s61, %s62
    %p76 = scmp.eq.s32.totalorder %s16, 7
    %p77 = por %p75, %p76
    %p79 = scmp.ne.s32.totalorder %s62, %s78
    %p80 = scmp.eq.s32.totalorder %s16, 0
    %p81 = por %p79, %p80
    %s82 = ssub.s32 %s18, %s25
    %p83 = scmp.eq.s32.totalorder %s82, 0
    %s85 = sadd.s32 %s84, 1
    %s86 = scalar_select %p83, %s84, %s85
    %p89 = pneg %p83
    %p90 = scmp.eq.s32.totalorder %s10, 7
    %p91 = por %p89, %p90
    %p92 = scmp.ne.s32.totalorder %s84, %s87
    %p93 = scmp.eq.s32.totalorder %s10, 0
    %p94 = por %p92, %p93
    %p95 = scmp.ne.s32.totalorder %s84, %s87
    %p96 = scmp.eq.s32.totalorder %s15, 7
    %p97 = por %p95, %p96
    %p98 = scmp.ne.s32.totalorder %s87, %s88
    %p99 = scmp.eq.s32.totalorder %s15, 0
    %p100 = por %p98, %p99
    %p101 = scmp.ne.s32.totalorder %s87, %s88
    %p102 = scmp.eq.s32.totalorder %s16, 7
    %p103 = por %p101, %p102
    %p105 = scmp.ne.s32.totalorder %s88, %s104
    %p106 = scmp.eq.s32.totalorder %s16, 0
    %p107 = por %p105, %p106
    %s108 = ssub.s32 %s17, %s29
    %p109 = scmp.eq.s32.totalorder %s108, 0
    %s111 = sadd.s32 %s110, 1
    %s112 = scalar_select %p109, %s110, %s111
    %p115 = pneg %p109
    %p116 = scmp.eq.s32.totalorder %s10, 7
    %p117 = por %p115, %p116
    %p118 = scmp.ne.s32.totalorder %s110, %s113
    %p119 = scmp.eq.s32.totalorder %s10, 0
    %p120 = por %p118, %p119
    %p121 = scmp.ne.s32.totalorder %s110, %s113
    %p122 = scmp.eq.s32.totalorder %s15, 7
    %p123 = por %p121, %p122
    %p124 = scmp.ne.s32.totalorder %s113, %s114
    %p125 = scmp.eq.s32.totalorder %s15, 0
    %p126 = por %p124, %p125
    %p127 = scmp.ne.s32.totalorder %s113, %s114
    %p128 = scmp.eq.s32.totalorder %s16, 7
    %p129 = por %p127, %p128
    %p131 = scmp.ne.s32.totalorder %s114, %s130
    %p132 = scmp.eq.s32.totalorder %s16, 0
    %p133 = por %p131, %p132
    %s134 = ssub.s32 %s17, %s29
    %s135 = ssub.s32 %s18, %s25
    %s136 = sor.u32 %s134, %s135
    %p137 = scmp.eq.s32.totalorder %s136, 0
    %s139 = sadd.s32 %s138, 1
    %s140 = scalar_select %p137, %s138, %s139
    %p143 = pneg %p137
    %p144 = scmp.eq.s32.totalorder %s10, 7
    %p145 = por %p143, %p144
    %p146 = scmp.ne.s32.totalorder %s138, %s141
    %p147 = scmp.eq.s32.totalorder %s10, 0
    %p148 = por %p146, %p147
    %p149 = scmp.ne.s32.totalorder %s138, %s141
    %p150 = scmp.eq.s32.totalorder %s15, 7
    %p151 = por %p149, %p150
    %p152 = scmp.ne.s32.totalorder %s141, %s142
    %p153 = scmp.eq.s32.totalorder %s15, 0
    %p154 = por %p152, %p153
    %p155 = scmp.ne.s32.totalorder %s141, %s142
    %p156 = scmp.eq.s32.totalorder %s16, 7
    %p157 = por %p155, %p156
    %p159 = scmp.ne.s32.totalorder %s142, %s158
    %p160 = scmp.eq.s32.totalorder %s16, 0
    %p161 = por %p159, %p160
    %p162 = scmp.le.s32.totalorder 1, %s10
    %p163 = scmp.lt.s32.totalorder %s10, 9
    %p164 = pnand %p162, %p163
    %p165 = pneg %p164
    // Predicated region
    $region9: #{encoder_layer_forward.4} parent=5 // pred_check
      _
    $region10: #{encoder_layer_forward.4} parent=5 // pred_check_branch
      %167 = sbr.rel (%p164) target = $region12
    $region11: #{encoder_layer_forward.4} parent=5 // pred_region
      %s168 = ssub.s32 %s10, 1
    $region12: #{encoder_layer_forward.4} parent=5 // pred_fallthru
      _
    %p169 = scmp.lt.s32.totalorder %s10, 8
    // Predicated region
    $region13: #{encoder_layer_forward.4} parent=5 // pred_check
      %p170 = pneg %p169
    $region14: #{encoder_layer_forward.4} parent=5 // pred_check_branch
      %172 = sbr.rel (%p170) target = $region16
    $region15: #{encoder_layer_forward.4} parent=5 // pred_region
      // Predicated region
      $region17: #{encoder_layer_forward.4} parent=15 // pred_check
        %p173 = pneg %p42
      $region18: #{encoder_layer_forward.4} parent=15 // pred_check_branch
        %175 = sbr.rel (%p173) target = $region20
      $region19: #{encoder_layer_forward.4} parent=15 // pred_region
        %p176 = scmp.lt.s32.totalorder %s17, 1
        %s177 = scalar_select %p176, %s17, 1
        %s178 = smul.addr %s177, 8
        %s179 = scalar_lea.vmem %s0, %s178
      $region20: #{encoder_layer_forward.4} parent=15 // pred_fallthru
        _
      // Predicated region
      $region21: #{encoder_layer_forward.4} parent=15 // pred_check
        %p180 = pneg %p68
      $region22: #{encoder_layer_forward.4} parent=15 // pred_check_branch
        %182 = sbr.rel (%p180) target = $region24
      $region23: #{encoder_layer_forward.4} parent=15 // pred_region
        %p183 = scmp.lt.s32.totalorder %s18, 3
        %s184 = scalar_select %p183, %s18, 3
        %s185 = smul.addr %s184, 4
        %s186 = smul.addr %s185, 4
        %s187 = scalar_lea.vmem %s1, %s186
      $region24: #{encoder_layer_forward.4} parent=15 // pred_fallthru
        _
      // Predicated region
      $region25: #{encoder_layer_forward.4} parent=15 // pred_check
        %p188 = pneg %p94
      $region26: #{encoder_layer_forward.4} parent=15 // pred_check_branch
        %190 = sbr.rel (%p188) target = $region28
      $region27: #{encoder_layer_forward.4} parent=15 // pred_region
        %p191 = scmp.lt.s32.totalorder %s18, 3
        %s192 = scalar_select %p191, %s18, 3
        %s193 = scalar_lea.vmem %s2, %s192
      $region28: #{encoder_layer_forward.4} parent=15 // pred_fallthru
        _
      // Predicated region
      $region29: #{encoder_layer_forward.4} parent=15 // pred_check
        %p194 = pneg %p120
      $region30: #{encoder_layer_forward.4} parent=15 // pred_check_branch
        %196 = sbr.rel (%p194) target = $region32
      $region31: #{encoder_layer_forward.4} parent=15 // pred_region
        %p197 = scmp.lt.s32.totalorder %s17, 1
        %s198 = scalar_select %p197, %s17, 1
        %s199 = scalar_lea.vmem %s3, %s198
      $region32: #{encoder_layer_forward.4} parent=15 // pred_fallthru
        _
    $region16: #{encoder_layer_forward.4} parent=5 // pred_fallthru
      _
    %p200 = scmp.le.s32.totalorder 1, %s10
    %p201 = scmp.lt.s32.totalorder %s10, 9
    %p202 = pnand %p200, %p201
    %p203 = pneg %p202
    // Predicated region
    $region33: #{encoder_layer_forward.4} parent=5 // pred_check
      _
    $region34: #{encoder_layer_forward.4} parent=5 // pred_check_branch
      %205 = sbr.rel (%p202) target = $region36
    $region35: #{encoder_layer_forward.4} parent=5 // pred_region
      %s206 = ssub.s32 %s10, 1
      %p207 = scmp.lt.s32.totalorder %s19, 1
      %s208 = scalar_select %p207, %s19, 1
      %s209 = smul.addr %s208, 8
      %s210 = scalar_lea.vmem %s0, %s209
      %p211 = pneg %p48
      %p212 = pneg %p45
      %p213 = scmp.lt.s32.totalorder %s20, 3
      %s214 = scalar_select %p213, %s20, 3
      %s215 = smul.addr %s214, 4
      %s216 = smul.addr %s215, 4
      %s217 = scalar_lea.vmem %s1, %s216
      %p218 = pneg %p74
      %p219 = pneg %p71
      %p220 = scmp.lt.s32.totalorder %s20, 3
      %s221 = scalar_select %p220, %s20, 3
      %s222 = scalar_lea.vmem %s2, %s221
      %p223 = pneg %p100
      %p224 = pneg %p97
      %p225 = scmp.lt.s32.totalorder %s19, 1
      %s226 = scalar_select %p225, %s19, 1
      %s227 = scalar_lea.vmem %s3, %s226
      %p228 = pneg %p126
      %p229 = pneg %p123
      %p230 = pneg %p154
      %p231 = pneg %p151
      %p232 = scmp.lt.s32.totalorder %s19, 1
      %s233 = scalar_select %p232, %s19, 1
      %p234 = scmp.lt.s32.totalorder %s20, 3
      %s235 = scalar_select %p234, %s20, 3
      %s236 = smul.addr %s233, 4
      %s237 = sadd.s32 %s235, %s236
      %s238 = smul.addr %s237, 4
      %s239 = scalar_lea.vmem %s4, %s238
      %p240 = scmp.lt.s32.totalorder %s19, 1
      %s241 = scalar_select %p240, %s19, 1
      %s242 = smul.addr %s241, 8
      %s243 = scalar_lea.vmem %s0, %s242
      %p244 = scmp.lt.s32.totalorder %s20, 3
      %s245 = scalar_select %p244, %s20, 3
      %s246 = smul.addr %s245, 4
      %s247 = smul.addr %s246, 4
      %s248 = scalar_lea.vmem %s1, %s247
      %p249 = scmp.lt.s32.totalorder %s20, 3
      %s250 = scalar_select %p249, %s20, 3
      %s251 = scalar_lea.vmem %s2, %s250
      %p252 = scmp.lt.s32.totalorder %s19, 1
      %s253 = scalar_select %p252, %s19, 1
      %s254 = scalar_lea.vmem %s3, %s253
      %p255 = scmp.lt.s32.totalorder %s19, 1
      %s256 = scalar_select %p255, %s19, 1
      %p257 = scmp.lt.s32.totalorder %s20, 3
      %s258 = scalar_select %p257, %s20, 3
      %s259 = smul.addr %s256, 4
      %s260 = sadd.s32 %s258, %s259
      %s261 = smul.addr %s260, 4
      %s262 = scalar_lea.vmem %s4, %s261
      %v264 = vld [vmem:[%s243] sm:$0xff]
      %v265 = vpack.c.bf16 %v264, %v264
      %v266 = vld [vmem:[%s248] sm:$0xf]
      %v267 = vld [vmem:[%s248 + $0x4] sm:$0xf]
      %v268 = vld [vmem:[%s248 + $0x8] sm:$0xf]
      %v269 = vld [vmem:[%s248 + $0xc] sm:$0xf]
      %v270 = vld [vmem:[%s251] sm:$0x1]
      %v272 = vlaneseq
      %v273 = vshrl.u32 %v272, 7
      %v274 = vsub.s32 0, %v273
      %v275 = vrot.slane %v270, %v274
      %v281 = vunpack.c.l.b16 %v266
      %v282 = vunpack.c.l.b16 %v267
      %v283 = vunpack.c.l.b16 %v268
      %v284 = vunpack.c.l.b16 %v269
      %v285 = vpack.c.b16 %v282, %v281
      %v286 = vpack.c.b16 %v284, %v283
      %vm289 = vcmask 261120
      %v291 = vsel %vm289, %v265, 0
      %293 = vmatprep.subr.bf16.mxu0 0
      %294 = vmatpush1.bf16.msra.mxu0 0
      %295 = vmatprep.subr.bf16.mxu0 0
      %296 = vmatpush1.bf16.msra.mxu0 0
      %297 = vmatprep.subr.bf16.mxu0 0
      %298 = vmatpush1.bf16.msra.mxu0 0
      %299 = vmatprep.subr.bf16.mxu0 0
      %300 = vmatpush1.bf16.msra.mxu0 0
      %301 = vmatprep.subr.bf16.mxu0 0
      %302 = vmatpush1.bf16.msra.mxu0 0
      %303 = vmatprep.subr.bf16.mxu0 0
      %304 = vmatpush1.bf16.msra.mxu0 0
      %305 = vmatprep.subr.bf16.mxu0 0
      %306 = vmatpush1.bf16.msra.mxu0 %v286
      %307 = vmatprep.subr.bf16.mxu0 0
      %308 = vmatpush1.bf16.msra.mxu0 %v285
      %309 = vmatprep.subr.bf16.mxu0 0
      %310 = vmatpush2.bf16.msra.mxu0 0
      %311 = vmatprep.subr.bf16.mxu0 0
      %312 = vmatpush2.bf16.msra.mxu0 0
      %313 = vmatprep.subr.bf16.mxu0 0
      %314 = vmatpush2.bf16.msra.mxu0 0
      %315 = vmatprep.subr.bf16.mxu0 0
      %316 = vmatpush2.bf16.msra.mxu0 0
      %317 = vmatprep.subr.bf16.mxu0 0
      %318 = vmatpush2.bf16.msra.mxu0 0
      %319 = vmatprep.subr.bf16.mxu0 0
      %320 = vmatpush2.bf16.msra.mxu0 0
      %321 = vmatprep.subr.bf16.mxu0 0
      %322 = vmatpush2.bf16.msra.mxu0 0
      %323 = vmatprep.subr.bf16.mxu0 0
      %324 = vmatpush2.bf16.msra.mxu0 0
      %325 = vmatprep.mubr.bf16.mxu0 0
      %326 = vmatmul.mubr.bf16.gmra.mxu0 %v291
      %v327 = vpop.f32.mrf.mxu0
      %v328 = vadd.f32 %v275, %v327
      %v329 = vpop.f32.mrf.mxu0
      %v330 = vpop.f32.mrf.mxu0
      %v331 = vpop.f32.mrf.mxu0
      %332 = vdwg.mxu0
      %v333 = vpack.c.bf16 %v328, %v328
      %335 = vrot.lane.b32.xlu0 %v333, 120
      %v336 = vpop.permute.xlu0 %335
      %vm337 = vcmask 64512
      %v339 = vsel %vm337, %v333, 0
      %v342 = vsel %vm337, %v336, 0
      %344 = vmatprep.subr.bf16.mxu0 0
      %345 = vmatpush1.bf16.xpose.msra.mxu0 0
      %346 = vmatprep.subr.bf16.mxu0 0
      %347 = vmatpush1.bf16.xpose.msra.mxu0 0
      %348 = vmatprep.subr.bf16.mxu0 0
      %349 = vmatpush1.bf16.xpose.msra.mxu0 0
      %350 = vmatprep.subr.bf16.mxu0 0
      %351 = vmatpush1.bf16.xpose.msra.mxu0 0
      %352 = vmatprep.subr.bf16.mxu0 0
      %353 = vmatpush1.bf16.xpose.msra.mxu0 0
      %354 = vmatprep.subr.bf16.mxu0 0
      %355 = vmatpush1.bf16.xpose.msra.mxu0 0
      %356 = vmatprep.subr.bf16.mxu0 0
      %357 = vmatpush1.bf16.xpose.msra.mxu0 0
      %358 = vmatprep.subr.bf16.mxu0 0
      %359 = vmatpush1.bf16.xpose.msra.mxu0 %v342
      %360 = vmatprep.subr.bf16.mxu0 0
      %361 = vmatpush2.bf16.xpose.msra.mxu0 0
      %362 = vmatprep.subr.bf16.mxu0 0
      %363 = vmatpush2.bf16.xpose.msra.mxu0 0
      %364 = vmatprep.subr.bf16.mxu0 0
      %365 = vmatpush2.bf16.xpose.msra.mxu0 0
      %366 = vmatprep.subr.bf16.mxu0 0
      %367 = vmatpush2.bf16.xpose.msra.mxu0 0
      %368 = vmatprep.subr.bf16.mxu0 0
      %369 = vmatpush2.bf16.xpose.msra.mxu0 0
      %370 = vmatprep.subr.bf16.mxu0 0
      %371 = vmatpush2.bf16.xpose.msra.mxu0 0
      %372 = vmatprep.subr.bf16.mxu0 0
      %373 = vmatpush2.bf16.xpose.msra.mxu0 0
      %374 = vmatprep.subr.bf16.mxu0 0
      %375 = vmatpush2.bf16.xpose.msra.mxu0 0
      %376 = vmatprep.mubr.bf16.mxu0 0
      %377 = vmatmul.mubr.bf16.gmra.mxu0 %v339
      %v378 = vpop.f32.mrf.mxu0
      %v379 = vadd.f32 0.0, %v378
      %v380 = vpop.f32.mrf.mxu0
      %v381 = vpop.f32.mrf.mxu0
      %v382 = vpop.f32.mrf.mxu0
      %383 = vdwg.mxu0
      %v384 = vmul.f32 %v379, 0.35355338
      %v385 = vld [vmem:[%s254] sm:$0x1]
      %v387 = vlaneseq
      %v388 = vshrl.u32 %v387, 7
      %v389 = vsub.s32 0, %v388
      %v390 = vrot.slane %v385, %v389
      %v392 = vadd.f32 %v384, %v390
      %v393 = vsel %vm337, %v392, -inf
      %394 = vmax.xlane.f32.xlu0 %v393
      %v395 = vpop.xlane.xlu0 %394
      %v396 = vsub.f32 %v392, %v395
      %v397 = vmul.f32 %v396, 1.442695
      %v398 = vpow.pop %v397
      %v399 = vsel %vm337, %v398, 0.0
      %400 = vadd.xlane.f32.xlu0 %v399
      %v401 = vpop.xlane.xlu0 %400
      %v402 = vrcp.pop %v401
      %v403 = vmul.f32 %v398, %v402
      %v404 = vpack.c.bf16 %v403, %v403
      %405 = vrot.lane.b32.xlu0 %v333, 112
      %v406 = vpop.permute.xlu0 %405
      %v408 = vsel %vm337, %v404, 0
      %vm410 = vcmask 1043456
      %v412 = vsel %vm410, %v406, 0
      %414 = vmatprep.subr.bf16.mxu0 0
      %415 = vmatpush1.bf16.msra.mxu0 0
      %416 = vmatprep.subr.bf16.mxu0 0
      %417 = vmatpush1.bf16.msra.mxu0 0
      %418 = vmatprep.subr.bf16.mxu0 0
      %419 = vmatpush1.bf16.msra.mxu0 0
      %420 = vmatprep.subr.bf16.mxu0 0
      %421 = vmatpush1.bf16.msra.mxu0 0
      %422 = vmatprep.subr.bf16.mxu0 0
      %423 = vmatpush1.bf16.msra.mxu0 0
      %424 = vmatprep.subr.bf16.mxu0 0
      %425 = vmatpush1.bf16.msra.mxu0 0
      %426 = vmatprep.subr.bf16.mxu0 0
      %427 = vmatpush1.bf16.msra.mxu0 0
      %428 = vmatprep.subr.bf16.mxu0 0
      %429 = vmatpush1.bf16.msra.mxu0 %v412
      %430 = vmatprep.subr.bf16.mxu0 0
      %431 = vmatpush2.bf16.msra.mxu0 0
      %432 = vmatprep.subr.bf16.mxu0 0
      %433 = vmatpush2.bf16.msra.mxu0 0
      %434 = vmatprep.subr.bf16.mxu0 0
      %435 = vmatpush2.bf16.msra.mxu0 0
      %436 = vmatprep.subr.bf16.mxu0 0
      %437 = vmatpush2.bf16.msra.mxu0 0
      %438 = vmatprep.subr.bf16.mxu0 0
      %439 = vmatpush2.bf16.msra.mxu0 0
      %440 = vmatprep.subr.bf16.mxu0 0
      %441 = vmatpush2.bf16.msra.mxu0 0
      %442 = vmatprep.subr.bf16.mxu0 0
      %443 = vmatpush2.bf16.msra.mxu0 0
      %444 = vmatprep.subr.bf16.mxu0 0
      %445 = vmatpush2.bf16.msra.mxu0 0
      %446 = vmatprep.mubr.bf16.mxu0 0
      %447 = vmatmul.mubr.bf16.gmra.mxu0 %v408
      %v448 = vpop.f32.mrf.mxu0
      %v449 = vadd.f32 0.0, %v448
      %v450 = vpop.f32.mrf.mxu0
      %v451 = vpop.f32.mrf.mxu0
      %v452 = vpop.f32.mrf.mxu0
      %453 = vdwg.mxu0
      %v454 = vpack.c.bf16 %v449, %v449
      %vm455 = vcmask 60416
      %456 = vst.msk [vmem:[%s262] sm:$0xf] %vm455, %v454
      %p457 = scmp.lt.s32.totalorder %s19, 1
      %s458 = scalar_select %p457, %s19, 1
      %p459 = scmp.lt.s32.totalorder %s20, 3
      %s460 = scalar_select %p459, %s20, 3
      %s461 = smul.addr %s458, 4
      %s462 = sadd.s32 %s460, %s461
      %s463 = smul.addr %s462, 4
      %s464 = scalar_lea.vmem %s4, %s463
      // Predicated region
      $region37: #{encoder_layer_forward.4} parent=35 // pred_check
        %p465 = pneg %p151
      $region38: #{encoder_layer_forward.4} parent=35 // pred_check_branch
        %467 = sbr.rel (%p465) target = $region40
      $region39: #{encoder_layer_forward.4} parent=35 // pred_region
        _
      $region40: #{encoder_layer_forward.4} parent=35 // pred_fallthru
        _
    $region36: #{encoder_layer_forward.4} parent=5 // pred_fallthru
      _
    %p468 = scmp.le.s32.totalorder 2, %s10
    // Predicated region
    $region41: #{encoder_layer_forward.4} parent=5 // pred_check
      %p469 = pneg %p468
    $region42: #{encoder_layer_forward.4} parent=5 // pred_check_branch
      %471 = sbr.rel (%p469) target = $region44
    $region43: #{encoder_layer_forward.4} parent=5 // pred_region
      %s472 = ssub.s32 %s10, 2
      // Predicated region
      $region45: #{encoder_layer_forward.4} parent=43 // pred_check
        %p473 = pneg %p157
      $region46: #{encoder_layer_forward.4} parent=43 // pred_check_branch
        %475 = sbr.rel (%p473) target = $region48
      $region47: #{encoder_layer_forward.4} parent=43 // pred_region
        %p476 = scmp.lt.s32.totalorder %s21, 1
        %s477 = scalar_select %p476, %s21, 1
        %p478 = scmp.lt.s32.totalorder %s22, 3
        %s479 = scalar_select %p478, %s22, 3
        %s480 = smul.addr %s477, 4
        %s481 = sadd.s32 %s479, %s480
        %s482 = smul.addr %s481, 4
        %s483 = scalar_lea.vmem %s4, %s482
      $region48: #{encoder_layer_forward.4} parent=43 // pred_fallthru
        _
    $region44: #{encoder_layer_forward.4} parent=5 // pred_fallthru
      _
  $region6: #{encoder_layer_forward.4} parent=0 // loop_footer
    %s14 = sadd.s32 1, %s10
  $region7: #{encoder_layer_forward.4} parent=0 // loop_footer_branch
    %9 = sbr.rel target = $region3
  $region8: #{encoder_layer_forward.4} parent=0 // loop_exit
    _

// kernel: encoder_layer_forward.5
$region0: #{encoder_layer_forward.5}
  #allocation0 [shape = 'u32[]', space=smem, size = 0x4, offset = 0x4, fixed_abs, tag = 'smem constant byte address 0x4 - core index']
  #allocation1 [shape = 'u32[144,128]{1,0:T(1,128)}', space=vmem, size = 0x12000, scoped, tag = 'internal scratch']
  #allocation2 [shape = 'f32[8,32]{1,0:T(8,128)}', space=vmem, size = 0x1000, scoped, tag = 'scratch operand']
  %s0 = inlined_call_operand.vmem [shape: bf16[2,4,8,8], index: 0, kind: input, shape index: {}]
  %s1 = inlined_call_operand.vmem [shape: bf16[4,8,32], index: 1, kind: input, shape index: {}]
  %s2 = inlined_call_operand.vmem [shape: f32[1,32], index: 2, kind: input, shape index: {}]
  %s3 = inlined_call_operand.vmem [shape: f32[2,8,32], index: 3, kind: input, shape index: {}]
  %s4 = inlined_call_operand.vmem [shape: f32[1,32], index: 4, kind: input, shape index: {}]
  %s5 = inlined_call_operand.vmem [shape: f32[1,32], index: 5, kind: input, shape index: {}]
  %s6 = inlined_call_operand.vmem [shape: f32[2,8,32], index: 6, kind: output, shape index: {}]
  %s7 = sld [smem:[#allocation0]]
  $region65: #{encoder_layer_forward.5} parent=0
    _
  %s9 = ssub.s32 1, %s7
  %s10 = scalar_select 0, %s9, %s7
  loop: start=0, step=1, limit=10
  $region2: #{encoder_layer_forward.5} parent=0 // loop_pre_header
    _
  $region3: #{encoder_layer_forward.5} parent=0 // loop_header
    %s12 = sphi 0, %s16
    %p13 = scmp.ge.s32.totalorder %s12, 10
    %s19 = sphi 0, %s31
    %s20 = sphi 0, %s27
    %s21 = sphi 0, %s19
    %s22 = sphi 0, %s20
    %s23 = sphi 0, %s21
    %s24 = sphi 0, %s22
    %s36 = sphi 0, %s38
    %s39 = sphi 0, %s36
    %s40 = sphi 0, %s39
    %s56 = sphi 0, %s40
    %s62 = sphi 0, %s64
    %s65 = sphi 0, %s62
    %s66 = sphi 0, %s65
    %s82 = sphi 0, %s66
    %s86 = sphi 0, %s86
    %s88 = sphi 0, %s86
    %s89 = sphi 0, %s88
    %s103 = sphi 0, %s89
    %s109 = sphi 0, %s111
    %s112 = sphi 0, %s109
    %s113 = sphi 0, %s112
    %s129 = sphi 0, %s113
    %s133 = sphi 0, %s133
    %s135 = sphi 0, %s133
    %s136 = sphi 0, %s135
    %s150 = sphi 0, %s136
    %s154 = sphi 0, %s154
    %s156 = sphi 0, %s154
    %s157 = sphi 0, %s156
    %s171 = sphi 0, %s157
    %s177 = sphi 0, %s179
    %s180 = sphi 0, %s177
    %s181 = sphi 0, %s180
    %s197 = sphi 0, %s181
  $region4: #{encoder_layer_forward.5} parent=0 // loop_header_branch
    %15 = sbr.rel (%p13) target = $region8
  $region5: #{encoder_layer_forward.5} parent=0 // loop_body
    %s17 = ssub.s32 %s12, 1
    %s18 = ssub.s32 %s12, 2
    %s25 = sadd.s32 1, %s20
    %p26 = scmp.ge.s32.totalorder %s25, 4
    %s27 = scalar_select %p26, 0, %s25
    %s28 = sadd.s32 1, %s19
    %s29 = scalar_select %p26, %s28, %s19
    %p30 = scmp.ge.s32.totalorder %s29, 2
    %s31 = scalar_select %p30, 0, %s29
    %s32 = ssub.s32 %s19, %s31
    %s33 = ssub.s32 %s20, %s27
    %s34 = sor.u32 %s32, %s33
    %p35 = scmp.eq.s32.totalorder %s34, 0
    %s37 = sadd.s32 %s36, 1
    %s38 = scalar_select %p35, %s36, %s37
    %p41 = pneg %p35
    %p42 = scmp.eq.s32.totalorder %s12, 7
    %p43 = por %p41, %p42
    %p44 = scmp.ne.s32.totalorder %s36, %s39
    %p45 = scmp.eq.s32.totalorder %s12, 0
    %p46 = por %p44, %p45
    %p47 = scmp.ne.s32.totalorder %s36, %s39
    %p48 = scmp.eq.s32.totalorder %s17, 7
    %p49 = por %p47, %p48
    %p50 = scmp.ne.s32.totalorder %s39, %s40
    %p51 = scmp.eq.s32.totalorder %s17, 0
    %p52 = por %p50, %p51
    %p53 = scmp.ne.s32.totalorder %s39, %s40
    %p54 = scmp.eq.s32.totalorder %s18, 7
    %p55 = por %p53, %p54
    %p57 = scmp.ne.s32.totalorder %s40, %s56
    %p58 = scmp.eq.s32.totalorder %s18, 0
    %p59 = por %p57, %p58
    %s60 = ssub.s32 %s20, %s27
    %p61 = scmp.eq.s32.totalorder %s60, 0
    %s63 = sadd.s32 %s62, 1
    %s64 = scalar_select %p61, %s62, %s63
    %p67 = pneg %p61
    %p68 = scmp.eq.s32.totalorder %s12, 7
    %p69 = por %p67, %p68
    %p70 = scmp.ne.s32.totalorder %s62, %s65
    %p71 = scmp.eq.s32.totalorder %s12, 0
    %p72 = por %p70, %p71
    %p73 = scmp.ne.s32.totalorder %s62, %s65
    %p74 = scmp.eq.s32.totalorder %s17, 7
    %p75 = por %p73, %p74
    %p76 = scmp.ne.s32.totalorder %s65, %s66
    %p77 = scmp.eq.s32.totalorder %s17, 0
    %p78 = por %p76, %p77
    %p79 = scmp.ne.s32.totalorder %s65, %s66
    %p80 = scmp.eq.s32.totalorder %s18, 7
    %p81 = por %p79, %p80
    %p83 = scmp.ne.s32.totalorder %s66, %s82
    %p84 = scmp.eq.s32.totalorder %s18, 0
    %p85 = por %p83, %p84
    %s87 = sadd.s32 %s86, 1
    %p90 = scmp.eq.s32.totalorder %s12, 7
    %p91 = scmp.ne.s32.totalorder %s86, %s88
    %p92 = scmp.eq.s32.totalorder %s12, 0
    %p93 = por %p91, %p92
    %p94 = scmp.ne.s32.totalorder %s86, %s88
    %p95 = scmp.eq.s32.totalorder %s17, 7
    %p96 = por %p94, %p95
    %p97 = scmp.ne.s32.totalorder %s88, %s89
    %p98 = scmp.eq.s32.totalorder %s17, 0
    %p99 = por %p97, %p98
    %p100 = scmp.ne.s32.totalorder %s88, %s89
    %p101 = scmp.eq.s32.totalorder %s18, 7
    %p102 = por %p100, %p101
    %p104 = scmp.ne.s32.totalorder %s89, %s103
    %p105 = scmp.eq.s32.totalorder %s18, 0
    %p106 = por %p104, %p105
    %s107 = ssub.s32 %s19, %s31
    %p108 = scmp.eq.s32.totalorder %s107, 0
    %s110 = sadd.s32 %s109, 1
    %s111 = scalar_select %p108, %s109, %s110
    %p114 = pneg %p108
    %p115 = scmp.eq.s32.totalorder %s12, 7
    %p116 = por %p114, %p115
    %p117 = scmp.ne.s32.totalorder %s109, %s112
    %p118 = scmp.eq.s32.totalorder %s12, 0
    %p119 = por %p117, %p118
    %p120 = scmp.ne.s32.totalorder %s109, %s112
    %p121 = scmp.eq.s32.totalorder %s17, 7
    %p122 = por %p120, %p121
    %p123 = scmp.ne.s32.totalorder %s112, %s113
    %p124 = scmp.eq.s32.totalorder %s17, 0
    %p125 = por %p123, %p124
    %p126 = scmp.ne.s32.totalorder %s112, %s113
    %p127 = scmp.eq.s32.totalorder %s18, 7
    %p128 = por %p126, %p127
    %p130 = scmp.ne.s32.totalorder %s113, %s129
    %p131 = scmp.eq.s32.totalorder %s18, 0
    %p132 = por %p130, %p131
    %s134 = sadd.s32 %s133, 1
    %p137 = scmp.eq.s32.totalorder %s12, 7
    %p138 = scmp.ne.s32.totalorder %s133, %s135
    %p139 = scmp.eq.s32.totalorder %s12, 0
    %p140 = por %p138, %p139
    %p141 = scmp.ne.s32.totalorder %s133, %s135
    %p142 = scmp.eq.s32.totalorder %s17, 7
    %p143 = por %p141, %p142
    %p144 = scmp.ne.s32.totalorder %s135, %s136
    %p145 = scmp.eq.s32.totalorder %s17, 0
    %p146 = por %p144, %p145
    %p147 = scmp.ne.s32.totalorder %s135, %s136
    %p148 = scmp.eq.s32.totalorder %s18, 7
    %p149 = por %p147, %p148
    %p151 = scmp.ne.s32.totalorder %s136, %s150
    %p152 = scmp.eq.s32.totalorder %s18, 0
    %p153 = por %p151, %p152
    %s155 = sadd.s32 %s154, 1
    %p158 = scmp.eq.s32.totalorder %s12, 7
    %p159 = scmp.ne.s32.totalorder %s154, %s156
    %p160 = scmp.eq.s32.totalorder %s12, 0
    %p161 = por %p159, %p160
    %p162 = scmp.ne.s32.totalorder %s154, %s156
    %p163 = scmp.eq.s32.totalorder %s17, 7
    %p164 = por %p162, %p163
    %p165 = scmp.ne.s32.totalorder %s156, %s157
    %p166 = scmp.eq.s32.totalorder %s17, 0
    %p167 = por %p165, %p166
    %p168 = scmp.ne.s32.totalorder %s156, %s157
    %p169 = scmp.eq.s32.totalorder %s18, 7
    %p170 = por %p168, %p169
    %p172 = scmp.ne.s32.totalorder %s157, %s171
    %p173 = scmp.eq.s32.totalorder %s18, 0
    %p174 = por %p172, %p173
    %s175 = ssub.s32 %s19, %s31
    %p176 = scmp.eq.s32.totalorder %s175, 0
    %s178 = sadd.s32 %s177, 1
    %s179 = scalar_select %p176, %s177, %s178
    %p182 = pneg %p176
    %p183 = scmp.eq.s32.totalorder %s12, 7
    %p184 = por %p182, %p183
    %p185 = scmp.ne.s32.totalorder %s177, %s180
    %p186 = scmp.eq.s32.totalorder %s12, 0
    %p187 = por %p185, %p186
    %p188 = scmp.ne.s32.totalorder %s177, %s180
    %p189 = scmp.eq.s32.totalorder %s17, 7
    %p190 = por %p188, %p189
    %p191 = scmp.ne.s32.totalorder %s180, %s181
    %p192 = scmp.eq.s32.totalorder %s17, 0
    %p193 = por %p191, %p192
    %p194 = scmp.ne.s32.totalorder %s180, %s181
    %p195 = scmp.eq.s32.totalorder %s18, 7
    %p196 = por %p194, %p195
    %p198 = scmp.ne.s32.totalorder %s181, %s197
    %p199 = scmp.eq.s32.totalorder %s18, 0
    %p200 = por %p198, %p199
    %p201 = scmp.le.s32.totalorder 1, %s12
    %p202 = scmp.lt.s32.totalorder %s12, 9
    %p203 = pnand %p201, %p202
    %p204 = pneg %p203
    // Predicated region
    $region9: #{encoder_layer_forward.5} parent=5 // pred_check
      _
    $region10: #{encoder_layer_forward.5} parent=5 // pred_check_branch
      %206 = sbr.rel (%p203) target = $region12
    $region11: #{encoder_layer_forward.5} parent=5 // pred_region
      %s207 = ssub.s32 %s12, 1
      // Predicated region
      $region13: #{encoder_layer_forward.5} parent=11 // pred_check
        %p208 = pneg %p99
      $region14: #{encoder_layer_forward.5} parent=11 // pred_check_branch
        %210 = sbr.rel (%p208) target = $region16
      $region15: #{encoder_layer_forward.5} parent=11 // pred_region
        _
      $region16: #{encoder_layer_forward.5} parent=11 // pred_fallthru
        _
      // Predicated region
      $region17: #{encoder_layer_forward.5} parent=11 // pred_check
        %p211 = pneg %p146
      $region18: #{encoder_layer_forward.5} parent=11 // pred_check_branch
        %213 = sbr.rel (%p211) target = $region20
      $region19: #{encoder_layer_forward.5} parent=11 // pred_region
        _
      $region20: #{encoder_layer_forward.5} parent=11 // pred_fallthru
        _
      // Predicated region
      $region21: #{encoder_layer_forward.5} parent=11 // pred_check
        %p214 = pneg %p167
      $region22: #{encoder_layer_forward.5} parent=11 // pred_check_branch
        %216 = sbr.rel (%p214) target = $region24
      $region23: #{encoder_layer_forward.5} parent=11 // pred_region
        _
      $region24: #{encoder_layer_forward.5} parent=11 // pred_fallthru
        _
    $region12: #{encoder_layer_forward.5} parent=5 // pred_fallthru
      _
    %p217 = scmp.lt.s32.totalorder %s12, 8
    // Predicated region
    $region25: #{encoder_layer_forward.5} parent=5 // pred_check
      %p218 = pneg %p217
    $region26: #{encoder_layer_forward.5} parent=5 // pred_check_branch
      %220 = sbr.rel (%p218) target = $region28
    $region27: #{encoder_layer_forward.5} parent=5 // pred_region
      // Predicated region
      $region29: #{encoder_layer_forward.5} parent=27 // pred_check
        %p221 = pneg %p46
      $region30: #{encoder_layer_forward.5} parent=27 // pred_check_branch
        %223 = sbr.rel (%p221) target = $region32
      $region31: #{encoder_layer_forward.5} parent=27 // pred_region
        %p224 = scmp.lt.s32.totalorder %s19, 1
        %s225 = scalar_select %p224, %s19, 1
        %p226 = scmp.lt.s32.totalorder %s20, 3
        %s227 = scalar_select %p226, %s20, 3
        %s228 = smul.addr %s225, 4
        %s229 = sadd.s32 %s227, %s228
        %s230 = smul.addr %s229, 4
        %s231 = scalar_lea.vmem %s0, %s230
      $region32: #{encoder_layer_forward.5} parent=27 // pred_fallthru
        _
      // Predicated region
      $region33: #{encoder_layer_forward.5} parent=27 // pred_check
        %p232 = pneg %p72
      $region34: #{encoder_layer_forward.5} parent=27 // pred_check_branch
        %234 = sbr.rel (%p232) target = $region36
      $region35: #{encoder_layer_forward.5} parent=27 // pred_region
        %p235 = scmp.lt.s32.totalorder %s20, 3
        %s236 = scalar_select %p235, %s20, 3
        %s237 = smul.addr %s236, 4
        %s238 = scalar_lea.vmem %s1, %s237
      $region36: #{encoder_layer_forward.5} parent=27 // pred_fallthru
        _
      // Predicated region
      $region37: #{encoder_layer_forward.5} parent=27 // pred_check
        %p239 = pneg %p119
      $region38: #{encoder_layer_forward.5} parent=27 // pred_check_branch
        %241 = sbr.rel (%p239) target = $region40
      $region39: #{encoder_layer_forward.5} parent=27 // pred_region
        %p242 = scmp.lt.s32.totalorder %s19, 1
        %s243 = scalar_select %p242, %s19, 1
        %s244 = smul.addr %s243, 8
        %s245 = scalar_lea.vmem %s3, %s244
      $region40: #{encoder_layer_forward.5} parent=27 // pred_fallthru
        _
    $region28: #{encoder_layer_forward.5} parent=5 // pred_fallthru
      _
    %p246 = scmp.le.s32.totalorder 1, %s12
    %p247 = scmp.lt.s32.totalorder %s12, 9
    %p248 = pnand %p246, %p247
    %p249 = pneg %p248
    // Predicated region
    $region41: #{encoder_layer_forward.5} parent=5 // pred_check
      _
    $region42: #{encoder_layer_forward.5} parent=5 // pred_check_branch
      %251 = sbr.rel (%p248) target = $region44
    $region43: #{encoder_layer_forward.5} parent=5 // pred_region
      %s252 = ssub.s32 %s12, 1
      %p253 = scmp.lt.s32.totalorder %s21, 1
      %s254 = scalar_select %p253, %s21, 1
      %p255 = scmp.lt.s32.totalorder %s22, 3
      %s256 = scalar_select %p255, %s22, 3
      %s257 = smul.addr %s254, 4
      %s258 = sadd.s32 %s256, %s257
      %s259 = smul.addr %s258, 4
      %s260 = scalar_lea.vmem %s0, %s259
      %p261 = pneg %p52
      %p262 = pneg %p49
      %p263 = scmp.lt.s32.totalorder %s22, 3
      %s264 = scalar_select %p263, %s22, 3
      %s265 = smul.addr %s264, 4
      %s266 = scalar_lea.vmem %s1, %s265
      %p267 = pneg %p78
      %p268 = pneg %p75
      %p269 = pneg %p99
      %p270 = pneg %p96
      %p271 = scmp.lt.s32.totalorder %s21, 1
      %s272 = scalar_select %p271, %s21, 1
      %s273 = smul.addr %s272, 8
      %s274 = scalar_lea.vmem %s3, %s273
      %p275 = pneg %p125
      %p276 = pneg %p122
      %p277 = pneg %p146
      %p278 = pneg %p143
      %p279 = pneg %p167
      %p280 = pneg %p164
      %p281 = pneg %p193
      %p282 = pneg %p190
      %p283 = scmp.lt.s32.totalorder %s21, 1
      %s284 = scalar_select %p283, %s21, 1
      %s285 = smul.addr %s284, 8
      %s286 = scalar_lea.vmem %s6, %s285
      %p287 = scmp.lt.s32.totalorder %s21, 1
      %s288 = scalar_select %p287, %s21, 1
      %p289 = scmp.lt.s32.totalorder %s22, 3
      %s290 = scalar_select %p289, %s22, 3
      %s291 = smul.addr %s288, 4
      %s292 = sadd.s32 %s290, %s291
      %s293 = smul.addr %s292, 4
      %s294 = scalar_lea.vmem %s0, %s293
      %p295 = scmp.lt.s32.totalorder %s22, 3
      %s296 = scalar_select %p295, %s22, 3
      %s297 = smul.addr %s296, 4
      %s298 = scalar_lea.vmem %s1, %s297
      %p299 = scmp.lt.s32.totalorder %s21, 1
      %s300 = scalar_select %p299, %s21, 1
      %s301 = smul.addr %s300, 8
      %s302 = scalar_lea.vmem %s3, %s301
      %p303 = scmp.lt.s32.totalorder %s21, 1
      %s304 = scalar_select %p303, %s21, 1
      %s305 = smul.addr %s304, 8
      %s306 = scalar_lea.vmem %s6, %s305
      %p308 = scmp.eq.s32.totalorder %s22, 0
      // Predicated region
      $region45: #{encoder_layer_forward.5} parent=43 // pred_check
        %p309 = pneg %p308
      $region46: #{encoder_layer_forward.5} parent=43 // pred_check_branch
        %311 = sbr.rel (%p309) target = $region48
      $region47: #{encoder_layer_forward.5} parent=43 // pred_region
        %vm312 = vcmask 261120
        %313 = vst.msk [vmem:[#allocation2] sm:$0xff] %vm312, 0.0
      $region48: #{encoder_layer_forward.5} parent=43 // pred_fallthru
        _
      %v314 = vld [vmem:[#allocation2] sm:$0xff]
      %v315 = vld [vmem:[%s294] sm:$0xf]
      %v316 = vld [vmem:[%s298] sm:$0xf]
      %vm317 = vcmask 64512
      %v319 = vsel %vm317, %v315, 0
      %vm321 = vcmask 1043456
      %v323 = vsel %vm321, %v316, 0
      %325 = vmatprep.subr.bf16.mxu0 0
      %326 = vmatpush1.bf16.msra.mxu0 0
      %327 = vmatprep.subr.bf16.mxu0 0
      %328 = vmatpush1.bf16.msra.mxu0 0
      %329 = vmatprep.subr.bf16.mxu0 0
      %330 = vmatpush1.bf16.msra.mxu0 0
      %331 = vmatprep.subr.bf16.mxu0 0
      %332 = vmatpush1.bf16.msra.mxu0 0
      %333 = vmatprep.subr.bf16.mxu0 0
      %334 = vmatpush1.bf16.msra.mxu0 0
      %335 = vmatprep.subr.bf16.mxu0 0
      %336 = vmatpush1.bf16.msra.mxu0 0
      %337 = vmatprep.subr.bf16.mxu0 0
      %338 = vmatpush1.bf16.msra.mxu0 0
      %339 = vmatprep.subr.bf16.mxu0 0
      %340 = vmatpush1.bf16.msra.mxu0 %v323
      %341 = vmatprep.subr.bf16.mxu0 0
      %342 = vmatpush2.bf16.msra.mxu0 0
      %343 = vmatprep.subr.bf16.mxu0 0
      %344 = vmatpush2.bf16.msra.mxu0 0
      %345 = vmatprep.subr.bf16.mxu0 0
      %346 = vmatpush2.bf16.msra.mxu0 0
      %347 = vmatprep.subr.bf16.mxu0 0
      %348 = vmatpush2.bf16.msra.mxu0 0
      %349 = vmatprep.subr.bf16.mxu0 0
      %350 = vmatpush2.bf16.msra.mxu0 0
      %351 = vmatprep.subr.bf16.mxu0 0
      %352 = vmatpush2.bf16.msra.mxu0 0
      %353 = vmatprep.subr.bf16.mxu0 0
      %354 = vmatpush2.bf16.msra.mxu0 0
      %355 = vmatprep.subr.bf16.mxu0 0
      %356 = vmatpush2.bf16.msra.mxu0 0
      %357 = vmatprep.mubr.bf16.mxu0 0
      %358 = vmatmul.mubr.bf16.gmra.mxu0 %v319
      %v359 = vpop.f32.mrf.mxu0
      %v360 = vadd.f32 0.0, %v359
      %v361 = vpop.f32.mrf.mxu0
      %v362 = vpop.f32.mrf.mxu0
      %v363 = vpop.f32.mrf.mxu0
      %364 = vdwg.mxu0
      %v365 = vadd.f32 %v314, %v360
      %vm366 = vcmask 261120
      %367 = vst.msk [vmem:[#allocation2] sm:$0xff] %vm366, %v365
      %p368 = scmp.eq.s32.totalorder %s22, 3
      // Predicated region
      $region49: #{encoder_layer_forward.5} parent=43 // pred_check
        %p369 = pneg %p368
      $region50: #{encoder_layer_forward.5} parent=43 // pred_check_branch
        %371 = sbr.rel (%p369) target = $region52
      $region51: #{encoder_layer_forward.5} parent=43 // pred_region
        %v372 = vld [vmem:[#allocation2] sm:$0xff]
        %v373 = vld [vmem:[%s2] sm:$0x1]
        %v375 = vlaneseq
        %v376 = vshrl.u32 %v375, 7
        %v377 = vsub.s32 0, %v376
        %v378 = vrot.slane %v373, %v377
        %v380 = vadd.f32 %v372, %v378
        %v381 = vld [vmem:[%s302] sm:$0xff]
        %v382 = vadd.f32 %v380, %v381
        %v383 = vsel %vm366, %v382, 0.0
        %384 = vadd.xlane.f32.xlu0 %v383
        %v385 = vpop.xlane.xlu0 %384
        %v386 = vrcp.pop 32.0
        %v387 = vmul.f32 %v385, %v386
        %v388 = vsub.f32 %v382, %v387
        %v389 = vmul.f32 %v388, %v388
        %v390 = vsel %vm366, %v389, 0.0
        %391 = vadd.xlane.f32.xlu0 %v390
        %v392 = vpop.xlane.xlu0 %391
        %v393 = vrcp.pop 31.0
        %v394 = vmul.f32 %v392, %v393
        %v395 = vadd.f32 %v394, 1e-12
        %v396 = vrsqrt.pop %v395
        %v397 = vmul.f32 %v388, %v396
        %v398 = vld [vmem:[%s4] sm:$0x1]
        %v400 = vlaneseq
        %v401 = vshrl.u32 %v400, 7
        %v402 = vsub.s32 0, %v401
        %v403 = vrot.slane %v398, %v402
        %v405 = vmul.f32 %v403, %v397
        %v406 = vld [vmem:[%s5] sm:$0x1]
        %v408 = vlaneseq
        %v409 = vshrl.u32 %v408, 7
        %v410 = vsub.s32 0, %v409
        %v411 = vrot.slane %v406, %v410
        %v413 = vadd.f32 %v405, %v411
        %414 = vst.msk [vmem:[%s306] sm:$0xff] %vm366, %v413
      $region52: #{encoder_layer_forward.5} parent=43 // pred_fallthru
        _
      %p415 = scmp.lt.s32.totalorder %s21, 1
      %s416 = scalar_select %p415, %s21, 1
      %s417 = smul.addr %s416, 8
      %s418 = scalar_lea.vmem %s6, %s417
      // Predicated region
      $region53: #{encoder_layer_forward.5} parent=43 // pred_check
        %p419 = pneg %p190
      $region54: #{encoder_layer_forward.5} parent=43 // pred_check_branch
        %421 = sbr.rel (%p419) target = $region56
      $region55: #{encoder_layer_forward.5} parent=43 // pred_region
        _
      $region56: #{encoder_layer_forward.5} parent=43 // pred_fallthru
        _
    $region44: #{encoder_layer_forward.5} parent=5 // pred_fallthru
      _
    %p422 = scmp.le.s32.totalorder 2, %s12
    // Predicated region
    $region57: #{encoder_layer_forward.5} parent=5 // pred_check
      %p423 = pneg %p422
    $region58: #{encoder_layer_forward.5} parent=5 // pred_check_branch
      %425 = sbr.rel (%p423) target = $region60
    $region59: #{encoder_layer_forward.5} parent=5 // pred_region
      %s426 = ssub.s32 %s12, 2
      // Predicated region
      $region61: #{encoder_layer_forward.5} parent=59 // pred_check
        %p427 = pneg %p196
      $region62: #{encoder_layer_forward.5} parent=59 // pred_check_branch
        %429 = sbr.rel (%p427) target = $region64
      $region63: #{encoder_layer_forward.5} parent=59 // pred_region
        %p430 = scmp.lt.s32.totalorder %s23, 1
        %s431 = scalar_select %p430, %s23, 1
        %s432 = smul.addr %s431, 8
        %s433 = scalar_lea.vmem %s6, %s432
      $region64: #{encoder_layer_forward.5} parent=59 // pred_fallthru
        _
    $region60: #{encoder_layer_forward.5} parent=5 // pred_fallthru
      _
  $region6: #{encoder_layer_forward.5} parent=0 // loop_footer
    %s16 = sadd.s32 1, %s12
  $region7: #{encoder_layer_forward.5} parent=0 // loop_footer_branch
    %11 = sbr.rel target = $region3
  $region8: #{encoder_layer_forward.5} parent=0 // loop_exit
    _

// kernel: encoder_layer_forward.6
$region0: #{encoder_layer_forward.6}
  #allocation0 [shape = 'u32[]', space=smem, size = 0x4, offset = 0x4, fixed_abs, tag = 'smem constant byte address 0x4 - core index']
  #allocation1 [shape = 'u32[144,128]{1,0:T(1,128)}', space=vmem, size = 0x12000, scoped, tag = 'internal scratch']
  #allocation2 [shape = 'f32[16,64]{1,0:T(8,128)}', space=vmem, size = 0x2000, scoped, tag = 'scratch operand']
  %s0 = inlined_call_operand.vmem [shape: f32[16,32], index: 0, kind: input, shape index: {}]
  %s1 = inlined_call_operand.vmem [shape: bf16[32,64], index: 1, kind: input, shape index: {}]
  %s2 = inlined_call_operand.vmem [shape: f32[1,64], index: 2, kind: input, shape index: {}]
  %s3 = inlined_call_operand.vmem [shape: bf16[16,64], index: 3, kind: output, shape index: {}]
  %s4 = sld [smem:[#allocation0]]
  $region30: #{encoder_layer_forward.6} parent=0
    _
  %s6 = ssub.s32 1, %s4
  %s7 = scalar_select 0, %s6, %s4
  // Predicated region
  $region2: #{encoder_layer_forward.6} parent=0 // pred_check
    _
  $region3: #{encoder_layer_forward.6} parent=0 // pred_check_branch
    %9 = sbr.rel (0) target = $region5
  $region4: #{encoder_layer_forward.6} parent=0 // pred_region
    _
  $region5: #{encoder_layer_forward.6} parent=0 // pred_fallthru
    _
  // Predicated region
  $region6: #{encoder_layer_forward.6} parent=0 // pred_check
    _
  $region7: #{encoder_layer_forward.6} parent=0 // pred_check_branch
    %11 = sbr.rel (0) target = $region9
  $region8: #{encoder_layer_forward.6} parent=0 // pred_region
    _
  $region9: #{encoder_layer_forward.6} parent=0 // pred_fallthru
    _
  // Predicated region
  $region10: #{encoder_layer_forward.6} parent=0 // pred_check
    _
  $region11: #{encoder_layer_forward.6} parent=0 // pred_check_branch
    %13 = sbr.rel (0) target = $region13
  $region12: #{encoder_layer_forward.6} parent=0 // pred_region
    _
  $region13: #{encoder_layer_forward.6} parent=0 // pred_fallthru
    _
  %p15 = scmp.eq.s32.totalorder 0, 0
  // Predicated region
  $region14: #{encoder_layer_forward.6} parent=0 // pred_check
    %p16 = pneg %p15
  $region15: #{encoder_layer_forward.6} parent=0 // pred_check_branch
    %18 = sbr.rel (%p16) target = $region17
  $region16: #{encoder_layer_forward.6} parent=0 // pred_region
    %vm19 = vcmask 523264
    %20 = vst.msk [vmem:[#allocation2] sm:$0xff] %vm19, 0.0
    %21 = vst.msk [vmem:[#allocation2 + $0x8] sm:$0xff] %vm19, 0.0
  $region17: #{encoder_layer_forward.6} parent=0 // pred_fallthru
    _
  %v22 = vld [vmem:[#allocation2] sm:$0xff]
  %v23 = vld [vmem:[#allocation2 + $0x8] sm:$0xff]
  %v24 = vld [vmem:[%s0] sm:$0xff]
  %v25 = vld [vmem:[%s0 + $0x8] sm:$0xff]
  %v26 = vpack.c.bf16 %v25, %v24
  %v27 = vld [vmem:[%s1] sm:$0xf]
  %v28 = vld [vmem:[%s1 + $0x4] sm:$0xf]
  %v29 = vld [vmem:[%s1 + $0x8] sm:$0xf]
  %v30 = vld [vmem:[%s1 + $0xc] sm:$0xf]
  %v35 = vunpack.c.l.b16 %v27
  %v36 = vunpack.c.l.b16 %v28
  %v37 = vunpack.c.l.b16 %v29
  %v38 = vunpack.c.l.b16 %v30
  %v39 = vpack.c.b16 %v36, %v35
  %v40 = vpack.c.b16 %v38, %v37
  %vm43 = vcmask 261120
  %v45 = vsel %vm43, %v26, 0
  %47 = vmatprep.subr.bf16.mxu0 0
  %48 = vmatpush1.bf16.msra.mxu0 0
  %49 = vmatprep.subr.bf16.mxu0 0
  %50 = vmatpush1.bf16.msra.mxu0 0
  %51 = vmatprep.subr.bf16.mxu0 0
  %52 = vmatpush1.bf16.msra.mxu0 0
  %53 = vmatprep.subr.bf16.mxu0 0
  %54 = vmatpush1.bf16.msra.mxu0 0
  %55 = vmatprep.subr.bf16.mxu0 0
  %56 = vmatpush1.bf16.msra.mxu0 0
  %57 = vmatprep.subr.bf16.mxu0 0
  %58 = vmatpush1.bf16.msra.mxu0 0
  %59 = vmatprep.subr.bf16.mxu0 0
  %60 = vmatpush1.bf16.msra.mxu0 %v40
  %61 = vmatprep.subr.bf16.mxu0 0
  %62 = vmatpush1.bf16.msra.mxu0 %v39
  %63 = vmatprep.subr.bf16.mxu0 0
  %64 = vmatpush2.bf16.msra.mxu0 0
  %65 = vmatprep.subr.bf16.mxu0 0
  %66 = vmatpush2.bf16.msra.mxu0 0
  %67 = vmatprep.subr.bf16.mxu0 0
  %68 = vmatpush2.bf16.msra.mxu0 0
  %69 = vmatprep.subr.bf16.mxu0 0
  %70 = vmatpush2.bf16.msra.mxu0 0
  %71 = vmatprep.subr.bf16.mxu0 0
  %72 = vmatpush2.bf16.msra.mxu0 0
  %73 = vmatprep.subr.bf16.mxu0 0
  %74 = vmatpush2.bf16.msra.mxu0 0
  %75 = vmatprep.subr.bf16.mxu0 0
  %76 = vmatpush2.bf16.msra.mxu0 0
  %77 = vmatprep.subr.bf16.mxu0 0
  %78 = vmatpush2.bf16.msra.mxu0 0
  %79 = vmatprep.mubr.bf16.mxu0 0
  %80 = vmatmul.mubr.bf16.gmra.mxu0 %v45
  %v81 = vpop.f32.mrf.mxu0
  %v82 = vadd.f32 0.0, %v81
  %v83 = vpop.f32.mrf.mxu0
  %v84 = vpop.f32.mrf.mxu0
  %v85 = vadd.f32 0.0, %v84
  %v86 = vpop.f32.mrf.mxu0
  %87 = vdwg.mxu0
  %v88 = vadd.f32 %v22, %v82
  %v89 = vadd.f32 %v23, %v85
  %vm90 = vcmask 523264
  %91 = vst.msk [vmem:[#allocation2] sm:$0xff] %vm90, %v88
  %92 = vst.msk [vmem:[#allocation2 + $0x8] sm:$0xff] %vm90, %v89
  // Predicated region
  $region18: #{encoder_layer_forward.6} parent=0 // pred_check
    %p93 = pneg %p15
  $region19: #{encoder_layer_forward.6} parent=0 // pred_check_branch
    %95 = sbr.rel (%p93) target = $region21
  $region20: #{encoder_layer_forward.6} parent=0 // pred_region
    %v96 = vld [vmem:[#allocation2] sm:$0xff]
    %v97 = vld [vmem:[#allocation2 + $0x8] sm:$0xff]
    %v98 = vld [vmem:[%s2] sm:$0x1]
    %v100 = vlaneseq
    %v101 = vshrl.u32 %v100, 7
    %v102 = vsub.s32 0, %v101
    %v103 = vrot.slane %v98, %v102
    %v105 = vadd.f32 %v96, %v103
    %v106 = vadd.f32 %v97, %v103
    %v107 = vmax.f32 %v105, 0.0
    %v108 = vmax.f32 %v106, 0.0
    %v109 = vpack.c.bf16 %v108, %v107
    %v111 = vunpack.c.l.b16 %v109
    %v112 = vunpack.c.h.b16 %v109
    %v113 = vpack.c.b16 %v111, %v111
    %v114 = vpack.c.b16 %v112, %v112
    %vm117 = vcmask 519168
    %118 = vst.msk [vmem:[%s3] sm:$0xf] %vm117, %v113
    %119 = vst.msk [vmem:[%s3 + $0x4] sm:$0xf] %vm117, %v114
  $region21: #{encoder_layer_forward.6} parent=0 // pred_fallthru
    _
  // Predicated region
  $region22: #{encoder_layer_forward.6} parent=0 // pred_check
    _
  $region23: #{encoder_layer_forward.6} parent=0 // pred_check_branch
    %121 = sbr.rel (0) target = $region25
  $region24: #{encoder_layer_forward.6} parent=0 // pred_region
    _
  $region25: #{encoder_layer_forward.6} parent=0 // pred_fallthru
    _
  // Predicated region
  $region26: #{encoder_layer_forward.6} parent=0 // pred_check
    _
  $region27: #{encoder_layer_forward.6} parent=0 // pred_check_branch
    %123 = sbr.rel (0) target = $region29
  $region28: #{encoder_layer_forward.6} parent=0 // pred_region
    _
  $region29: #{encoder_layer_forward.6} parent=0 // pred_fallthru
    _

// kernel: encoder_layer_forward.7
$region0: #{encoder_layer_forward.7}
  #allocation0 [shape = 'u32[]', space=smem, size = 0x4, offset = 0x4, fixed_abs, tag = 'smem constant byte address 0x4 - core index']
  #allocation1 [shape = 'u32[144,128]{1,0:T(1,128)}', space=vmem, size = 0x12000, scoped, tag = 'internal scratch']
  #allocation2 [shape = 'f32[16,32]{1,0:T(8,128)}', space=vmem, size = 0x2000, scoped, tag = 'scratch operand']
  %s0 = inlined_call_operand.vmem [shape: bf16[16,64], index: 0, kind: input, shape index: {}]
  %s1 = inlined_call_operand.vmem [shape: bf16[64,32], index: 1, kind: input, shape index: {}]
  %s2 = inlined_call_operand.vmem [shape: f32[1,32], index: 2, kind: input, shape index: {}]
  %s3 = inlined_call_operand.vmem [shape: f32[16,32], index: 3, kind: input, shape index: {}]
  %s4 = inlined_call_operand.vmem [shape: f32[1,32], index: 4, kind: input, shape index: {}]
  %s5 = inlined_call_operand.vmem [shape: f32[1,32], index: 5, kind: input, shape index: {}]
  %s6 = inlined_call_operand.hbm [shape: f32[16,32], index: 6, kind: output, shape index: {}]
  %s7 = sld [smem:[#allocation0]]
  $region42: #{encoder_layer_forward.7} parent=0
    _
  %s9 = ssub.s32 1, %s7
  %s10 = scalar_select 0, %s9, %s7
  $region1: #{encoder_layer_forward.7} parent=0
    #allocation3 [shape = 'u8[8192]{0}', space=vmem, size = 0x2000, scoped, tag = 'output window, operand 0, single buffered']
    #allocation4 [shape = 's32[1]{0}', space=sflag, size = 0x4, scoped, tag = 'scoped memory for encoder_layer_forward.7']
    %11 = vsyncpa [#allocation4], 0
    // Predicated region
    $region2: #{encoder_layer_forward.7} parent=1 // pred_check
      _
    $region3: #{encoder_layer_forward.7} parent=1 // pred_check_branch
      %13 = sbr.rel (0) target = $region5
    $region4: #{encoder_layer_forward.7} parent=1 // pred_region
      _
    $region5: #{encoder_layer_forward.7} parent=1 // pred_fallthru
      _
    // Predicated region
    $region6: #{encoder_layer_forward.7} parent=1 // pred_check
      _
    $region7: #{encoder_layer_forward.7} parent=1 // pred_check_branch
      %15 = sbr.rel (0) target = $region9
    $region8: #{encoder_layer_forward.7} parent=1 // pred_region
      _
    $region9: #{encoder_layer_forward.7} parent=1 // pred_fallthru
      _
    // Predicated region
    $region10: #{encoder_layer_forward.7} parent=1 // pred_check
      _
    $region11: #{encoder_layer_forward.7} parent=1 // pred_check_branch
      %17 = sbr.rel (0) target = $region13
    $region12: #{encoder_layer_forward.7} parent=1 // pred_region
      _
    $region13: #{encoder_layer_forward.7} parent=1 // pred_fallthru
      _
    // Predicated region
    $region14: #{encoder_layer_forward.7} parent=1 // pred_check
      _
    $region15: #{encoder_layer_forward.7} parent=1 // pred_check_branch
      %19 = sbr.rel (0) target = $region17
    $region16: #{encoder_layer_forward.7} parent=1 // pred_region
      _
    $region17: #{encoder_layer_forward.7} parent=1 // pred_fallthru
      _
    // Predicated region
    $region18: #{encoder_layer_forward.7} parent=1 // pred_check
      _
    $region19: #{encoder_layer_forward.7} parent=1 // pred_check_branch
      %21 = sbr.rel (0) target = $region21
    $region20: #{encoder_layer_forward.7} parent=1 // pred_region
      _
    $region21: #{encoder_layer_forward.7} parent=1 // pred_fallthru
      _
    // Predicated region
    $region22: #{encoder_layer_forward.7} parent=1 // pred_check
      _
    $region23: #{encoder_layer_forward.7} parent=1 // pred_check_branch
      %23 = sbr.rel (0) target = $region25
    $region24: #{encoder_layer_forward.7} parent=1 // pred_region
      _
    $region25: #{encoder_layer_forward.7} parent=1 // pred_fallthru
      _
    %p25 = scmp.eq.s32.totalorder 0, 0
    // Predicated region
    $region26: #{encoder_layer_forward.7} parent=1 // pred_check
      %p26 = pneg %p25
    $region27: #{encoder_layer_forward.7} parent=1 // pred_check_branch
      %28 = sbr.rel (%p26) target = $region29
    $region28: #{encoder_layer_forward.7} parent=1 // pred_region
      %vm29 = vcmask 261120
      %30 = vst.msk [vmem:[#allocation2] sm:$0xff] %vm29, 0.0
      %31 = vst.msk [vmem:[#allocation2 + $0x8] sm:$0xff] %vm29, 0.0
    $region29: #{encoder_layer_forward.7} parent=1 // pred_fallthru
      _
    %v32 = vld [vmem:[#allocation2] sm:$0xff]
    %v33 = vld [vmem:[#allocation2 + $0x8] sm:$0xff]
    %v34 = vld [vmem:[%s0] sm:$0xf]
    %v35 = vld [vmem:[%s0 + $0x4] sm:$0xf]
    %v36 = vld [vmem:[%s1] sm:$0xf]
    %v37 = vld [vmem:[%s1 + $0x4] sm:$0xf]
    %v38 = vld [vmem:[%s1 + $0x8] sm:$0xf]
    %v39 = vld [vmem:[%s1 + $0xc] sm:$0xf]
    %v40 = vld [vmem:[%s1 + $0x10] sm:$0xf]
    %v41 = vld [vmem:[%s1 + $0x14] sm:$0xf]
    %v42 = vld [vmem:[%s1 + $0x18] sm:$0xf]
    %v43 = vld [vmem:[%s1 + $0x1c] sm:$0xf]
    %v46 = vunpack.c.l.b16 %v34
    %v47 = vunpack.c.l.b16 %v35
    %v48 = vpack.c.b16 %v47, %v46
    %v57 = vunpack.c.l.b16 %v36
    %v58 = vunpack.c.l.b16 %v37
    %v59 = vunpack.c.l.b16 %v38
    %v60 = vunpack.c.l.b16 %v39
    %v61 = vunpack.c.l.b16 %v40
    %v62 = vunpack.c.l.b16 %v41
    %v63 = vunpack.c.l.b16 %v42
    %v64 = vunpack.c.l.b16 %v43
    %v65 = vpack.c.b16 %v58, %v57
    %v66 = vpack.c.b16 %v60, %v59
    %v67 = vpack.c.b16 %v62, %v61
    %v68 = vpack.c.b16 %v64, %v63
    %vm73 = vcmask 523264
    %v75 = vsel %vm73, %v48, 0
    %77 = vmatprep.subr.bf16.mxu0 0
    %78 = vmatpush1.bf16.msra.mxu0 0
    %79 = vmatprep.subr.bf16.mxu0 0
    %80 = vmatpush1.bf16.msra.mxu0 0
    %81 = vmatprep.subr.bf16.mxu0 0
    %82 = vmatpush1.bf16.msra.mxu0 0
    %83 = vmatprep.subr.bf16.mxu0 0
    %84 = vmatpush1.bf16.msra.mxu0 0
    %85 = vmatprep.subr.bf16.mxu0 0
    %86 = vmatpush1.bf16.msra.mxu0 %v68
    %87 = vmatprep.subr.bf16.mxu0 0
    %88 = vmatpush1.bf16.msra.mxu0 %v67
    %89 = vmatprep.subr.bf16.mxu0 0
    %90 = vmatpush1.bf16.msra.mxu0 %v66
    %91 = vmatprep.subr.bf16.mxu0 0
    %92 = vmatpush1.bf16.msra.mxu0 %v65
    %93 = vmatprep.subr.bf16.mxu0 0
    %94 = vmatpush2.bf16.msra.mxu0 0
    %95 = vmatprep.subr.bf16.mxu0 0
    %96 = vmatpush2.bf16.msra.mxu0 0
    %97 = vmatprep.subr.bf16.mxu0 0
    %98 = vmatpush2.bf16.msra.mxu0 0
    %99 = vmatprep.subr.bf16.mxu0 0
    %100 = vmatpush2.bf16.msra.mxu0 0
    %101 = vmatprep.subr.bf16.mxu0 0
    %102 = vmatpush2.bf16.msra.mxu0 0
    %103 = vmatprep.subr.bf16.mxu0 0
    %104 = vmatpush2.bf16.msra.mxu0 0
    %105 = vmatprep.subr.bf16.mxu0 0
    %106 = vmatpush2.bf16.msra.mxu0 0
    %107 = vmatprep.subr.bf16.mxu0 0
    %108 = vmatpush2.bf16.msra.mxu0 0
    %109 = vmatprep.mubr.bf16.mxu0 0
    %110 = vmatmul.mubr.bf16.gmra.mxu0 %v75
    %v111 = vpop.f32.mrf.mxu0
    %v112 = vadd.f32 0.0, %v111
    %v113 = vpop.f32.mrf.mxu0
    %v114 = vpop.f32.mrf.mxu0
    %v115 = vadd.f32 0.0, %v114
    %v116 = vpop.f32.mrf.mxu0
    %117 = vdwg.mxu0
    %v118 = vadd.f32 %v32, %v112
    %v119 = vadd.f32 %v33, %v115
    %vm120 = vcmask 261120
    %121 = vst.msk [vmem:[#allocation2] sm:$0xff] %vm120, %v118
    %122 = vst.msk [vmem:[#allocation2 + $0x8] sm:$0xff] %vm120, %v119
    // Predicated region
    $region30: #{encoder_layer_forward.7} parent=1 // pred_check
      %p123 = pneg %p25
    $region31: #{encoder_layer_forward.7} parent=1 // pred_check_branch
      %125 = sbr.rel (%p123) target = $region33
    $region32: #{encoder_layer_forward.7} parent=1 // pred_region
      %v126 = vld [vmem:[#allocation2] sm:$0xff]
      %v127 = vld [vmem:[#allocation2 + $0x8] sm:$0xff]
      %v128 = vld [vmem:[%s2] sm:$0x1]
      %v130 = vlaneseq
      %v131 = vshrl.u32 %v130, 7
      %v132 = vsub.s32 0, %v131
      %v133 = vrot.slane %v128, %v132
      %v135 = vadd.f32 %v126, %v133
      %v136 = vadd.f32 %v127, %v133
      %v137 = vld [vmem:[%s3] sm:$0xff]
      %v138 = vld [vmem:[%s3 + $0x8] sm:$0xff]
      %v139 = vadd.f32 %v135, %v137
      %v140 = vadd.f32 %v136, %v138
      %v141 = vsel %vm120, %v139, 0.0
      %142 = vadd.xlane.f32.xlu0 %v141
      %v143 = vpop.xlane.xlu0 %142
      %v144 = vsel %vm120, %v140, 0.0
      %145 = vadd.xlane.f32.xlu0 %v144
      %v146 = vpop.xlane.xlu0 %145
      %v147 = vrcp.pop 32.0
      %v148 = vmul.f32 %v143, %v147
      %v149 = vmul.f32 %v146, %v147
      %v150 = vsub.f32 %v139, %v148
      %v151 = vsub.f32 %v140, %v149
      %v152 = vmul.f32 %v150, %v150
      %v153 = vmul.f32 %v151, %v151
      %v154 = vsel %vm120, %v152, 0.0
      %155 = vadd.xlane.f32.xlu0 %v154
      %v156 = vpop.xlane.xlu0 %155
      %v157 = vsel %vm120, %v153, 0.0
      %158 = vadd.xlane.f32.xlu0 %v157
      %v159 = vpop.xlane.xlu0 %158
      %v160 = vrcp.pop 31.0
      %v161 = vmul.f32 %v156, %v160
      %v162 = vmul.f32 %v159, %v160
      %v163 = vadd.f32 %v161, 1e-12
      %v164 = vadd.f32 %v162, 1e-12
      %v165 = vrsqrt.pop %v163
      %v166 = vrsqrt.pop %v164
      %v167 = vmul.f32 %v150, %v165
      %v168 = vmul.f32 %v151, %v166
      %v169 = vld [vmem:[%s4] sm:$0x1]
      %v171 = vlaneseq
      %v172 = vshrl.u32 %v171, 7
      %v173 = vsub.s32 0, %v172
      %v174 = vrot.slane %v169, %v173
      %v176 = vmul.f32 %v174, %v167
      %v177 = vmul.f32 %v174, %v168
      %v178 = vld [vmem:[%s5] sm:$0x1]
      %v180 = vlaneseq
      %v181 = vshrl.u32 %v180, 7
      %v182 = vsub.s32 0, %v181
      %v183 = vrot.slane %v178, %v182
      %v185 = vadd.f32 %v176, %v183
      %v186 = vadd.f32 %v177, %v183
      %187 = vst.msk [vmem:[#allocation3] sm:$0xff] %vm120, %v185
      %188 = vst.msk [vmem:[#allocation3 + $0x8] sm:$0xff] %vm120, %v186
    $region33: #{encoder_layer_forward.7} parent=1 // pred_fallthru
      _
    // Predicated region
    $region34: #{encoder_layer_forward.7} parent=1 // pred_check
      _
    $region35: #{encoder_layer_forward.7} parent=1 // pred_check_branch
      %190 = sbr.rel (0) target = $region37
    $region36: #{encoder_layer_forward.7} parent=1 // pred_region
      %s192 = ssub.s32 256, 256
      %193 = vsyncadd [#allocation4], %s192
      %s194 = sshll.u32 [#allocation3], 4
      %s195 = int_to_ptr.vmem [resolvable:$true] %s194
      %200 = dma.vmem_to_hbm [thread:$0]  %s195, 256, %s6, [#allocation4], 128, 128, 8
    $region37: #{encoder_layer_forward.7} parent=1 // pred_fallthru
      _
    // Predicated region
    $region38: #{encoder_layer_forward.7} parent=1 // pred_check
      _
    $region39: #{encoder_layer_forward.7} parent=1 // pred_check_branch
      %202 = sbr.rel (0) target = $region41
    $region40: #{encoder_layer_forward.7} parent=1 // pred_region
      %203 = dma.done [#allocation4], 256
    $region41: #{encoder_layer_forward.7} parent=1 // pred_fallthru
      _
    %204 = vsyncpa [#allocation4], 1

</llo_original>
